<compile_context>
chip_gen: v7x
topology: tpu7x:2x2x1
jax: 0.10.0
libtpu: 0.0.40
codegen_flags: <defaults>
</compile_context>

<pallas_src>
import functools
import math

import jax
import jax.numpy as jnp
from jax.experimental import pallas as pl
from jax.experimental.pallas import tpu as pltpu

# Keep well under v7x's 64 MiB physical VMEM (also fine on v5e/v6e 128 MiB).
_VMEM_LIMIT = 48 * 1024 * 1024


def _tile(dim, target, align):
    """Largest multiple of `align` <= target that divides dim, else the full dim.

    Guarantees the resulting block dim is either a multiple of `align`
    (8 for sublane dims, 128 for lane dims) or equal to the full dim, which
    satisfies Pallas' (8, 128) block-shape constraint.
    """
    if dim <= target:
        return dim
    t = (min(target, dim) // align) * align
    while t >= align:
        if dim % t == 0:
            return t
        t -= align
    return dim


# --------------------------------------------------------------------------
# Tiled linear:  y = act(x @ w + b)
# --------------------------------------------------------------------------
def _linear_kernel(x_ref, w_ref, b_ref, o_ref, acc_ref, *, activation):
    @pl.when(pl.program_id(2) == 0)
    def _init():
        acc_ref[...] = jnp.zeros_like(acc_ref)

    acc_ref[...] += jnp.dot(
        x_ref[...].astype(jnp.bfloat16),      # bf16 operands -> MXU peak
        w_ref[...].astype(jnp.bfloat16),
        preferred_element_type=jnp.float32,   # f32 accumulation
    )

    @pl.when(pl.program_id(2) == pl.num_programs(2) - 1)
    def _finalize():
        y = acc_ref[...] + b_ref[...]          # f32 epilogue (v5e friendly)
        if activation == "relu":
            y = jnp.maximum(y, 0.0)
        o_ref[...] = y.astype(o_ref.dtype)


def linear(x2d, w, b, activation=None, out_dtype=jnp.float32):
    """x2d: (M, K) f32/bf16, w: (K, N) bf16, b: (N,) f32 -> (M, N) out_dtype."""
    M, K = x2d.shape
    N = w.shape[1]
    tm = _tile(M, 256, 8)
    tk = _tile(K, 512, 128)
    tn = _tile(N, 512, 128)
    grid = (M // tm, N // tn, K // tk)
    return pl.pallas_call(
        functools.partial(_linear_kernel, activation=activation),
        out_shape=jax.ShapeDtypeStruct((M, N), out_dtype),
        grid=grid,
        in_specs=[
            pl.BlockSpec((tm, tk), lambda i, j, k: (i, k)),
            pl.BlockSpec((tk, tn), lambda i, j, k: (k, j)),
            pl.BlockSpec((1, tn), lambda i, j, k: (0, j)),
        ],
        out_specs=pl.BlockSpec((tm, tn), lambda i, j, k: (i, j)),
        scratch_shapes=[pltpu.VMEM((tm, tn), jnp.float32)],
        compiler_params=pltpu.CompilerParams(
            dimension_semantics=("parallel", "parallel", "arbitrary"),
            vmem_limit_bytes=_VMEM_LIMIT,
        ),
    )(x2d, w, b.reshape(1, N).astype(jnp.float32))


# --------------------------------------------------------------------------
# Fused residual-add + LayerNorm (row-tiled)
# --------------------------------------------------------------------------
def _add_layernorm_kernel(x_ref, r_ref, g_ref, b_ref, o_ref):
    x = x_ref[...].astype(jnp.float32) + r_ref[...].astype(jnp.float32)
    mu = jnp.mean(x, axis=-1, keepdims=True)
    var = jnp.mean(jnp.square(x - mu), axis=-1, keepdims=True)
    y = (x - mu) * jax.lax.rsqrt(var + 1e-5)   # PyTorch LayerNorm default eps
    o_ref[...] = (y * g_ref[...] + b_ref[...]).astype(o_ref.dtype)


def add_layernorm(x2d, res2d, gamma, beta):
    """LayerNorm(x2d + res2d).  x2d/res2d: (M, D), gamma/beta: (D,)."""
    M, D = x2d.shape
    tm = _tile(M, 512, 8)
    grid = (M // tm,)
    return pl.pallas_call(
        _add_layernorm_kernel,
        out_shape=jax.ShapeDtypeStruct((M, D), jnp.float32),
        grid=grid,
        in_specs=[
            pl.BlockSpec((tm, D), lambda i: (i, 0)),
            pl.BlockSpec((tm, D), lambda i: (i, 0)),
            pl.BlockSpec((1, D), lambda i: (0, 0)),
            pl.BlockSpec((1, D), lambda i: (0, 0)),
        ],
        out_specs=pl.BlockSpec((tm, D), lambda i: (i, 0)),
        compiler_params=pltpu.CompilerParams(
            dimension_semantics=("parallel",),
            vmem_limit_bytes=_VMEM_LIMIT,
        ),
    )(x2d, res2d, gamma.reshape(1, D), beta.reshape(1, D))


# --------------------------------------------------------------------------
# Scaled dot-product attention: one grid step per batch, all heads at once.
# Mask is pre-baked as an additive bf16 bias (0 keep / -1e9 mask).
# --------------------------------------------------------------------------
def _attention_kernel(q_ref, k_ref, v_ref, bias_ref, o_ref, *, scale):
    q = q_ref[0]                                   # (H, Sq, dk) bf16
    k = k_ref[0]                                   # (H, Sk, dk) bf16
    v = v_ref[0]                                   # (H, Sk, dk) bf16
    bias = bias_ref[0].astype(jnp.float32)         # (Sq, Sk)

    # Batched matmul over heads; contraction over dk directly (no explicit .T).
    s = jnp.einsum("hqd,hkd->hqk", q, k, preferred_element_type=jnp.float32)
    s = s * scale + bias[None, :, :]
    s = s - jnp.max(s, axis=-1, keepdims=True)     # numerically-stable softmax (f32)
    p = jnp.exp(s)
    p = p * pl.reciprocal(jnp.sum(p, axis=-1, keepdims=True), approx=True)
    ctx = jnp.einsum("hqk,hkd->hqd", p.astype(v.dtype), v,
                     preferred_element_type=jnp.float32)
    o_ref[0] = ctx.astype(o_ref.dtype)


def scaled_dot_product_attention(q, k, v, bias):
    """q/k/v: (B, H, S, dk) bf16, bias: (B, Sq, Sk) bf16 -> (B, H, Sq, dk) bf16."""
    B, H, Sq, dk = q.shape
    Sk = k.shape[2]
    scale = 1.0 / math.sqrt(dk)
    # TODO(synk): for long sequences, tile over Sk with an online-softmax
    # (flash) accumulator instead of materializing the full (H, Sq, Sk) scores.
    return pl.pallas_call(
        functools.partial(_attention_kernel, scale=scale),
        out_shape=jax.ShapeDtypeStruct((B, H, Sq, dk), jnp.bfloat16),
        grid=(B,),
        in_specs=[
            pl.BlockSpec((1, H, Sq, dk), lambda b: (b, 0, 0, 0)),
            pl.BlockSpec((1, H, Sk, dk), lambda b: (b, 0, 0, 0)),
            pl.BlockSpec((1, H, Sk, dk), lambda b: (b, 0, 0, 0)),
            pl.BlockSpec((1, Sq, Sk), lambda b: (b, 0, 0)),
        ],
        out_specs=pl.BlockSpec((1, H, Sq, dk), lambda b: (b, 0, 0, 0)),
        compiler_params=pltpu.CompilerParams(
            dimension_semantics=("parallel",),
            vmem_limit_bytes=_VMEM_LIMIT,
        ),
    )(q, k, v, bias)


# --------------------------------------------------------------------------
# Encoder building blocks (plain-JAX glue around the kernels)
# --------------------------------------------------------------------------
def multi_head_self_attention(x, mask_bias, p, head):
    B, S, D = x.shape
    dk = D // head
    x2 = x.reshape(B * S, D)

    # Fused QKV projection: one kernel, one read of x.  Output in bf16.
    qkv = linear(x2, p["wqkv"], p["bqkv"], out_dtype=jnp.bfloat16)     # (B*S, 3D)
    q, k, v = jnp.split(qkv, 3, axis=-1)
    q = q.reshape(B, S, head, dk).transpose(0, 2, 1, 3)
    k = k.reshape(B, S, head, dk).transpose(0, 2, 1, 3)
    v = v.reshape(B, S, head, dk).transpose(0, 2, 1, 3)

    ctx = scaled_dot_product_attention(q, k, v, mask_bias)             # (B,H,S,dk) bf16
    ctx = ctx.transpose(0, 2, 1, 3).reshape(B * S, D)
    out = linear(ctx, p["wo"], p["bo"])                                # (B*S, D) f32
    return out


def encoder_layer(x, mask_bias, p, head):
    B, S, D = x.shape
    x2 = x.reshape(B * S, D)

    # Post-LN transformer block: x = LN(x + SelfAttn(x)); x = LN(x + FFN(x))
    attn = multi_head_self_attention(x, mask_bias, p, head)            # (B*S, D) f32
    x2 = add_layernorm(x2, attn, p["ln1_g"], p["ln1_b"])               # residual + LN fused

    h = linear(x2, p["w1"], p["b1"], activation="relu",
               out_dtype=jnp.bfloat16)                                 # (B*S, d_ff) bf16
    ff = linear(h, p["w2"], p["b2"])                                   # (B*S, D) f32
    x2 = add_layernorm(x2, ff, p["ln2_g"], p["ln2_b"])
    return x2.reshape(B, S, D)


def positional_encoding(d_model, max_len):
    pos = jnp.arange(max_len, dtype=jnp.float32)[:, None]
    even = jnp.arange(0, d_model, 2, dtype=jnp.float32)
    div_term = jnp.power(10000.0, even / d_model)
    pe = jnp.zeros((max_len, d_model), jnp.float32)
    pe = pe.at[:, 0::2].set(jnp.sin(pos / div_term))
    pe = pe.at[:, 1::2].set(jnp.cos(pos / div_term))
    return pe


def make_padding_mask(q_tok, k_tok, padding_idx):
    # 1 = keep, 0 = mask (equivalent to the (B, 1, Sq, Sk) torch mask;
    # the head dim is broadcast inside the attention kernel).
    qm = (q_tok != padding_idx)[:, :, None]     # (B, Sq, 1)
    km = (k_tok != padding_idx)[:, None, :]     # (B, 1, Sk)
    return (qm & km).astype(jnp.int32)          # (B, Sq, Sk)


def encoder_forward(params, tokens, padding_mask, *, head):
    """Mirrors Encoder.forward(x, padding_mask) (attention scores discarded)."""
    B, S = tokens.shape
    # Pre-bake the mask as a compact additive bf16 bias (built once, reused by
    # every layer) instead of streaming an int32 compare/select mask per layer.
    mask_bias = jnp.where(padding_mask != 0, 0.0, -1e9).astype(jnp.bfloat16)

    x = jnp.take(params["emb"], tokens, axis=0)          # embedding gather (glue)
    x = x + params["pe"][:S, :][None, :, :]              # positional encoding
    # dropout(p) -> identity (inference)
    for lp in params["layers"]:
        x = encoder_layer(x, mask_bias, lp, head)
    return x


# --------------------------------------------------------------------------
# Deterministic parameter initialization
# --------------------------------------------------------------------------
class KeyGen:
    def __init__(self, key):
        self.key = key

    def __call__(self):
        self.key, sub = jax.random.split(self.key)
        return sub


def _w(kg, din, dout):
    # Matmul weights stored bf16 (MXU operands / halved HBM traffic).
    return (jax.random.normal(kg(), (din, dout), jnp.float32) * 0.02).astype(jnp.bfloat16)


def init_encoder(key, n_input_vocab, d_model, head, d_ff, max_len, padding_idx, n_layers):
    kg = KeyGen(key)
    emb = jax.random.normal(kg(), (n_input_vocab, d_model), jnp.float32) * 0.02
    emb = emb.at[padding_idx].set(0.0)  # nn.Embedding padding_idx row is zero

    layers = []
    for _ in range(n_layers):
        layers.append({
            # fused Q|K|V projection
            "wqkv": _w(kg, d_model, 3 * d_model),
            "bqkv": jnp.zeros((3 * d_model,), jnp.float32),
            "wo": _w(kg, d_model, d_model),
            "bo": jnp.zeros((d_model,), jnp.float32),
            "w1": _w(kg, d_model, d_ff),
            "b1": jnp.zeros((d_ff,), jnp.float32),
            "w2": _w(kg, d_ff, d_model),
            "b2": jnp.zeros((d_model,), jnp.float32),
            "ln1_g": jnp.ones((d_model,), jnp.float32),
            "ln1_b": jnp.zeros((d_model,), jnp.float32),
            "ln2_g": jnp.ones((d_model,), jnp.float32),
            "ln2_b": jnp.zeros((d_model,), jnp.float32),
        })
    return {
        "emb": emb,
        "pe": positional_encoding(d_model, max_len),
        "layers": layers,
    }


# --------------------------------------------------------------------------
if __name__ == "__main__":
    # Small config consistent with the module's constructor.
    n_input_vocab = 32
    d_model = 32
    head = 4
    d_ff = 64
    max_len = 16
    padding_idx = 0
    n_layers = 2
    B, S = 2, 8

    root = jax.random.PRNGKey(0)
    k_par, k_src = jax.random.split(root)

    params = init_encoder(k_par, n_input_vocab, d_model, head, d_ff,
                          max_len, padding_idx, n_layers)

    tokens = jax.random.randint(k_src, (B, S), 1, n_input_vocab, dtype=jnp.int32)
    # Insert some padding tokens so the padding mask is exercised.
    tokens = tokens.at[1, -2:].set(padding_idx)
    padding_mask = make_padding_mask(tokens, tokens, padding_idx)   # (B, S, S)

    fwd = jax.jit(functools.partial(encoder_forward, head=head))
    out = fwd(params, tokens, padding_mask)
    jax.block_until_ready(out)

    assert out.shape == (B, S, d_model)
    assert bool(jnp.all(jnp.isfinite(out)))
    print("KERNEL_OK")
</pallas_src>

<mosaic_0001>
module attributes {stable_mosaic.version = 11 : i64} {
  func.func @_linear_kernel(%arg0: i32, %arg1: i32, %arg2: i32, %arg3: memref<16x32xf32, #tpu.memory_space<vmem>>, %arg4: memref<32x96xbf16, #tpu.memory_space<vmem>>, %arg5: memref<1x96xf32, #tpu.memory_space<vmem>>, %arg6: memref<16x96xbf16, #tpu.memory_space<vmem>>, %arg7: memref<16x96xf32, #tpu.memory_space<vmem>>) attributes {dimension_semantics = [#tpu.dimension_semantics<parallel>, #tpu.dimension_semantics<parallel>, #tpu.dimension_semantics<arbitrary>], iteration_bounds = array<i64: 1, 1, 1>, scalar_prefetch = 0 : i64, scratch_operands = 1 : i64, tpu.core_type = #tpu.core_type<tc>, window_params = [{transform_indices = @transform_0, window_bounds = array<i64: 16, 32>}, {transform_indices = @transform_1, window_bounds = array<i64: 32, 96>}, {transform_indices = @transform_2, window_bounds = array<i64: 1, 96>}, {transform_indices = @transform_3, window_bounds = array<i64: 16, 96>}]} {
    %c0_i32 = arith.constant 0 : i32
    %0 = arith.cmpi eq, %arg2, %c0_i32 : i32
    %1 = arith.extui %0 : i1 to i32
    %c0_i32_0 = arith.constant 0 : i32
    %2 = arith.cmpi ne, %1, %c0_i32_0 : i32
    scf.if %2 {
      %cst_10 = arith.constant 0.000000e+00 : f32
      %13 = vector.broadcast %cst_10 : f32 to vector<16x96xf32>
      %c0_11 = arith.constant 0 : index
      %c0_12 = arith.constant 0 : index
      %14 = vector.load %arg7[%c0_11, %c0_12] : memref<16x96xf32, #tpu.memory_space<vmem>>, vector<16x96xf32>
      tpu.vector_store %arg7[%c0_11, %c0_12], %13 {strides = array<i32>} : memref<16x96xf32, #tpu.memory_space<vmem>>, vector<16x96xf32>,
    } else {
    }
    %c0 = arith.constant 0 : index
    %c0_1 = arith.constant 0 : index
    %3 = vector.load %arg7[%c0, %c0_1] : memref<16x96xf32, #tpu.memory_space<vmem>>, vector<16x96xf32>
    %c0_2 = arith.constant 0 : index
    %c0_3 = arith.constant 0 : index
    %4 = vector.load %arg3[%c0_2, %c0_3] : memref<16x32xf32, #tpu.memory_space<vmem>>, vector<16x32xf32>
    %5 = arith.truncf %4 : vector<16x32xf32> to vector<16x32xbf16>
    %c0_4 = arith.constant 0 : index
    %c0_5 = arith.constant 0 : index
    %6 = vector.load %arg4[%c0_4, %c0_5] : memref<32x96xbf16, #tpu.memory_space<vmem>>, vector<32x96xbf16>
    %cst = arith.constant dense<0.000000e+00> : vector<16x96xf32>
    %7 = tpu.matmul %5, %6, %cst {dimension_numbers = #tpu.dot_dimension_numbers<[1], [0], [0], [1], [0, 0, 1, 1], [], []>} : vector<16x32xbf16>, vector<32x96xbf16>, vector<16x96xf32> -> vector<16x96xf32>
    %8 = arith.addf %3, %7 : vector<16x96xf32>
    %c0_6 = arith.constant 0 : index
    %c0_7 = arith.constant 0 : index
    %9 = vector.load %arg7[%c0_6, %c0_7] : memref<16x96xf32, #tpu.memory_space<vmem>>, vector<16x96xf32>
    tpu.vector_store %arg7[%c0_6, %c0_7], %8 {strides = array<i32>} : memref<16x96xf32, #tpu.memory_space<vmem>>, vector<16x96xf32>,
    %c0_i32_8 = arith.constant 0 : i32
    %10 = arith.cmpi eq, %arg2, %c0_i32_8 : i32
    %11 = arith.extui %10 : i1 to i32
    %c0_i32_9 = arith.constant 0 : i32
    %12 = arith.cmpi ne, %11, %c0_i32_9 : i32
    scf.if %12 {
      %c0_10 = arith.constant 0 : index
      %c0_11 = arith.constant 0 : index
      %13 = vector.load %arg7[%c0_10, %c0_11] : memref<16x96xf32, #tpu.memory_space<vmem>>, vector<16x96xf32>
      %c0_12 = arith.constant 0 : index
      %c0_13 = arith.constant 0 : index
      %14 = vector.load %arg5[%c0_12, %c0_13] : memref<1x96xf32, #tpu.memory_space<vmem>>, vector<1x96xf32>
      %15 = vector.broadcast %14 : vector<1x96xf32> to vector<16x96xf32>
      %16 = arith.addf %13, %15 : vector<16x96xf32>
      %17 = arith.truncf %16 : vector<16x96xf32> to vector<16x96xbf16>
      %c0_14 = arith.constant 0 : index
      %c0_15 = arith.constant 0 : index
      %18 = vector.load %arg6[%c0_14, %c0_15] : memref<16x96xbf16, #tpu.memory_space<vmem>>, vector<16x96xbf16>
      tpu.vector_store %arg6[%c0_14, %c0_15], %17 {strides = array<i32>} : memref<16x96xbf16, #tpu.memory_space<vmem>>, vector<16x96xbf16>,
    } else {
    }
    return
  }
  func.func @transform_0(%arg0: i32, %arg1: i32, %arg2: i32) -> (i32, i32) {
    %c0_i32 = arith.constant 0 : i32
    return %arg0, %arg2 : i32, i32
  }
  func.func @transform_1(%arg0: i32, %arg1: i32, %arg2: i32) -> (i32, i32) {
    %c0_i32 = arith.constant 0 : i32
    return %arg2, %arg1 : i32, i32
  }
  func.func @transform_2(%arg0: i32, %arg1: i32, %arg2: i32) -> (i32, i32) {
    %c0_i32 = arith.constant 0 : i32
    %c0_i32_0 = arith.constant 0 : i32
    return %c0_i32, %arg1 : i32, i32
  }
  func.func @transform_3(%arg0: i32, %arg1: i32, %arg2: i32) -> (i32, i32) {
    %c0_i32 = arith.constant 0 : i32
    return %arg0, %arg1 : i32, i32
  }
}

module attributes {stable_mosaic.version = 11 : i64} {
  func.func @_attention_kernel(%arg0: i32, %arg1: memref<1x4x8x8xbf16, #tpu.memory_space<vmem>>, %arg2: memref<1x4x8x8xbf16, #tpu.memory_space<vmem>>, %arg3: memref<1x4x8x8xbf16, #tpu.memory_space<vmem>>, %arg4: memref<1x8x8xbf16, #tpu.memory_space<vmem>>, %arg5: memref<1x4x8x8xbf16, #tpu.memory_space<vmem>>) attributes {dimension_semantics = [#tpu.dimension_semantics<parallel>], iteration_bounds = array<i64: 2>, scalar_prefetch = 0 : i64, scratch_operands = 0 : i64, tpu.core_type = #tpu.core_type<tc>, window_params = [{transform_indices = @transform_0, window_bounds = array<i64: 1, 4, 8, 8>}, {transform_indices = @transform_1, window_bounds = array<i64: 1, 4, 8, 8>}, {transform_indices = @transform_2, window_bounds = array<i64: 1, 4, 8, 8>}, {transform_indices = @transform_3, window_bounds = array<i64: 1, 8, 8>}, {transform_indices = @transform_4, window_bounds = array<i64: 1, 4, 8, 8>}]} {
    %c0 = arith.constant 0 : index
    %c0_0 = arith.constant 0 : index
    %c0_1 = arith.constant 0 : index
    %c0_2 = arith.constant 0 : index
    %0 = vector.load %arg1[%c0, %c0_0, %c0_1, %c0_2] : memref<1x4x8x8xbf16, #tpu.memory_space<vmem>>, vector<1x4x8x8xbf16>
    %1 = vector.shape_cast %0 : vector<1x4x8x8xbf16> to vector<4x8x8xbf16>
    %c0_3 = arith.constant 0 : index
    %c0_4 = arith.constant 0 : index
    %c0_5 = arith.constant 0 : index
    %c0_6 = arith.constant 0 : index
    %2 = vector.load %arg2[%c0_3, %c0_4, %c0_5, %c0_6] : memref<1x4x8x8xbf16, #tpu.memory_space<vmem>>, vector<1x4x8x8xbf16>
    %3 = vector.shape_cast %2 : vector<1x4x8x8xbf16> to vector<4x8x8xbf16>
    %c0_7 = arith.constant 0 : index
    %c0_8 = arith.constant 0 : index
    %c0_9 = arith.constant 0 : index
    %c0_10 = arith.constant 0 : index
    %4 = vector.load %arg3[%c0_7, %c0_8, %c0_9, %c0_10] : memref<1x4x8x8xbf16, #tpu.memory_space<vmem>>, vector<1x4x8x8xbf16>
    %5 = vector.shape_cast %4 : vector<1x4x8x8xbf16> to vector<4x8x8xbf16>
    %c0_11 = arith.constant 0 : index
    %c0_12 = arith.constant 0 : index
    %c0_13 = arith.constant 0 : index
    %6 = vector.load %arg4[%c0_11, %c0_12, %c0_13] : memref<1x8x8xbf16, #tpu.memory_space<vmem>>, vector<1x8x8xbf16>
    %7 = vector.shape_cast %6 : vector<1x8x8xbf16> to vector<8x8xbf16>
    %8 = arith.extf %7 : vector<8x8xbf16> to vector<8x8xf32>
    "tpu.trace_start"() <{level = 10 : i32, message = "hqd,hkd->hqk"}> : () -> ()
    %cst = arith.constant dense<0.000000e+00> : vector<4x8x8xf32>
    %9 = tpu.matmul %1, %3, %cst {dimension_numbers = #tpu.dot_dimension_numbers<[2], [2], [1], [1], [0, 0, 0, 1, 1, 1], [0], [0]>} : vector<4x8x8xbf16>, vector<4x8x8xbf16>, vector<4x8x8xf32> -> vector<4x8x8xf32>
    "tpu.trace_stop"() : () -> ()
    %cst_14 = arith.constant 0.353553385 : f32
    %10 = vector.broadcast %cst_14 : f32 to vector<4x8x8xf32>
    %11 = arith.mulf %9, %10 : vector<4x8x8xf32>
    %12 = vector.shape_cast %8 : vector<8x8xf32> to vector<1x8x8xf32>
    %13 = vector.broadcast %12 : vector<1x8x8xf32> to vector<4x8x8xf32>
    %14 = arith.addf %11, %13 : vector<4x8x8xf32>
    %cst_15 = arith.constant dense<0xFF800000> : vector<4x8xf32>
    %15 = vector.multi_reduction <maximumf>, %14, %cst_15 [2] : vector<4x8x8xf32> to vector<4x8xf32>
    %16 = vector.shape_cast %15 : vector<4x8xf32> to vector<4x8x1xf32>
    %17 = vector.broadcast %16 : vector<4x8x1xf32> to vector<4x8x8xf32>
    %18 = arith.subf %14, %17 : vector<4x8x8xf32>
    %19 = math.exp %18 : vector<4x8x8xf32>
    %cst_16 = arith.constant dense<0.000000e+00> : vector<4x8xf32>
    %20 = vector.multi_reduction <add>, %19, %cst_16 [2] : vector<4x8x8xf32> to vector<4x8xf32>
    %21 = vector.shape_cast %20 : vector<4x8xf32> to vector<4x8x1xf32>
    %22 = tpu.reciprocal %21 {approx = true} : vector<4x8x1xf32> -> vector<4x8x1xf32>
    %23 = vector.broadcast %22 : vector<4x8x1xf32> to vector<4x8x8xf32>
    %24 = arith.mulf %19, %23 : vector<4x8x8xf32>
    %25 = arith.truncf %24 : vector<4x8x8xf32> to vector<4x8x8xbf16>
    "tpu.trace_start"() <{level = 10 : i32, message = "hqk,hkd->hqd"}> : () -> ()
    %cst_17 = arith.constant dense<0.000000e+00> : vector<4x8x8xf32>
    %26 = tpu.matmul %25, %5, %cst_17 {dimension_numbers = #tpu.dot_dimension_numbers<[2], [1], [1], [2], [0, 0, 0, 1, 1, 2], [0], [0]>} : vector<4x8x8xbf16>, vector<4x8x8xbf16>, vector<4x8x8xf32> -> vector<4x8x8xf32>
    "tpu.trace_stop"() : () -> ()
    %27 = arith.truncf %26 : vector<4x8x8xf32> to vector<4x8x8xbf16>
    %c0_18 = arith.constant 0 : index
    %c0_19 = arith.constant 0 : index
    %c0_20 = arith.constant 0 : index
    %c0_21 = arith.constant 0 : index
    %28 = vector.load %arg5[%c0_18, %c0_19, %c0_20, %c0_21] : memref<1x4x8x8xbf16, #tpu.memory_space<vmem>>, vector<1x4x8x8xbf16>
    %29 = vector.shape_cast %28 : vector<1x4x8x8xbf16> to vector<4x8x8xbf16>
    %30 = vector.shape_cast %27 : vector<4x8x8xbf16> to vector<1x4x8x8xbf16>
    tpu.vector_store %arg5[%c0_18, %c0_19, %c0_20, %c0_21], %30 {strides = array<i32>} : memref<1x4x8x8xbf16, #tpu.memory_space<vmem>>, vector<1x4x8x8xbf16>,
    return
  }
  func.func @transform_0(%arg0: i32) -> (i32, i32, i32, i32) {
    %c0_i32 = arith.constant 0 : i32
    %c0_i32_0 = arith.constant 0 : i32
    %c0_i32_1 = arith.constant 0 : i32
    %c0_i32_2 = arith.constant 0 : i32
    return %arg0, %c0_i32, %c0_i32_0, %c0_i32_1 : i32, i32, i32, i32
  }
  func.func @transform_1(%arg0: i32) -> (i32, i32, i32, i32) {
    %c0_i32 = arith.constant 0 : i32
    %c0_i32_0 = arith.constant 0 : i32
    %c0_i32_1 = arith.constant 0 : i32
    %c0_i32_2 = arith.constant 0 : i32
    return %arg0, %c0_i32, %c0_i32_0, %c0_i32_1 : i32, i32, i32, i32
  }
  func.func @transform_2(%arg0: i32) -> (i32, i32, i32, i32) {
    %c0_i32 = arith.constant 0 : i32
    %c0_i32_0 = arith.constant 0 : i32
    %c0_i32_1 = arith.constant 0 : i32
    %c0_i32_2 = arith.constant 0 : i32
    return %arg0, %c0_i32, %c0_i32_0, %c0_i32_1 : i32, i32, i32, i32
  }
  func.func @transform_3(%arg0: i32) -> (i32, i32, i32) {
    %c0_i32 = arith.constant 0 : i32
    %c0_i32_0 = arith.constant 0 : i32
    %c0_i32_1 = arith.constant 0 : i32
    return %arg0, %c0_i32, %c0_i32_0 : i32, i32, i32
  }
  func.func @transform_4(%arg0: i32) -> (i32, i32, i32, i32) {
    %c0_i32 = arith.constant 0 : i32
    %c0_i32_0 = arith.constant 0 : i32
    %c0_i32_1 = arith.constant 0 : i32
    %c0_i32_2 = arith.constant 0 : i32
    return %arg0, %c0_i32, %c0_i32_0, %c0_i32_1 : i32, i32, i32, i32
  }
}

module attributes {stable_mosaic.version = 11 : i64} {
  func.func @_linear_kernel(%arg0: i32, %arg1: i32, %arg2: i32, %arg3: memref<16x32xbf16, #tpu.memory_space<vmem>>, %arg4: memref<32x32xbf16, #tpu.memory_space<vmem>>, %arg5: memref<1x32xf32, #tpu.memory_space<vmem>>, %arg6: memref<16x32xf32, #tpu.memory_space<vmem>>, %arg7: memref<16x32xf32, #tpu.memory_space<vmem>>) attributes {dimension_semantics = [#tpu.dimension_semantics<parallel>, #tpu.dimension_semantics<parallel>, #tpu.dimension_semantics<arbitrary>], iteration_bounds = array<i64: 1, 1, 1>, scalar_prefetch = 0 : i64, scratch_operands = 1 : i64, tpu.core_type = #tpu.core_type<tc>, window_params = [{transform_indices = @transform_0, window_bounds = array<i64: 16, 32>}, {transform_indices = @transform_1, window_bounds = array<i64: 32, 32>}, {transform_indices = @transform_2, window_bounds = array<i64: 1, 32>}, {transform_indices = @transform_3, window_bounds = array<i64: 16, 32>}]} {
    %c0_i32 = arith.constant 0 : i32
    %0 = arith.cmpi eq, %arg2, %c0_i32 : i32
    %1 = arith.extui %0 : i1 to i32
    %c0_i32_0 = arith.constant 0 : i32
    %2 = arith.cmpi ne, %1, %c0_i32_0 : i32
    scf.if %2 {
      %cst_10 = arith.constant 0.000000e+00 : f32
      %12 = vector.broadcast %cst_10 : f32 to vector<16x32xf32>
      %c0_11 = arith.constant 0 : index
      %c0_12 = arith.constant 0 : index
      %13 = vector.load %arg7[%c0_11, %c0_12] : memref<16x32xf32, #tpu.memory_space<vmem>>, vector<16x32xf32>
      tpu.vector_store %arg7[%c0_11, %c0_12], %12 {strides = array<i32>} : memref<16x32xf32, #tpu.memory_space<vmem>>, vector<16x32xf32>,
    } else {
    }
    %c0 = arith.constant 0 : index
    %c0_1 = arith.constant 0 : index
    %3 = vector.load %arg7[%c0, %c0_1] : memref<16x32xf32, #tpu.memory_space<vmem>>, vector<16x32xf32>
    %c0_2 = arith.constant 0 : index
    %c0_3 = arith.constant 0 : index
    %4 = vector.load %arg3[%c0_2, %c0_3] : memref<16x32xbf16, #tpu.memory_space<vmem>>, vector<16x32xbf16>
    %c0_4 = arith.constant 0 : index
    %c0_5 = arith.constant 0 : index
    %5 = vector.load %arg4[%c0_4, %c0_5] : memref<32x32xbf16, #tpu.memory_space<vmem>>, vector<32x32xbf16>
    %cst = arith.constant dense<0.000000e+00> : vector<16x32xf32>
    %6 = tpu.matmul %4, %5, %cst {dimension_numbers = #tpu.dot_dimension_numbers<[1], [0], [0], [1], [0, 0, 1, 1], [], []>} : vector<16x32xbf16>, vector<32x32xbf16>, vector<16x32xf32> -> vector<16x32xf32>
    %7 = arith.addf %3, %6 : vector<16x32xf32>
    %c0_6 = arith.constant 0 : index
    %c0_7 = arith.constant 0 : index
    %8 = vector.load %arg7[%c0_6, %c0_7] : memref<16x32xf32, #tpu.memory_space<vmem>>, vector<16x32xf32>
    tpu.vector_store %arg7[%c0_6, %c0_7], %7 {strides = array<i32>} : memref<16x32xf32, #tpu.memory_space<vmem>>, vector<16x32xf32>,
    %c0_i32_8 = arith.constant 0 : i32
    %9 = arith.cmpi eq, %arg2, %c0_i32_8 : i32
    %10 = arith.extui %9 : i1 to i32
    %c0_i32_9 = arith.constant 0 : i32
    %11 = arith.cmpi ne, %10, %c0_i32_9 : i32
    scf.if %11 {
      %c0_10 = arith.constant 0 : index
      %c0_11 = arith.constant 0 : index
      %12 = vector.load %arg7[%c0_10, %c0_11] : memref<16x32xf32, #tpu.memory_space<vmem>>, vector<16x32xf32>
      %c0_12 = arith.constant 0 : index
      %c0_13 = arith.constant 0 : index
      %13 = vector.load %arg5[%c0_12, %c0_13] : memref<1x32xf32, #tpu.memory_space<vmem>>, vector<1x32xf32>
      %14 = vector.broadcast %13 : vector<1x32xf32> to vector<16x32xf32>
      %15 = arith.addf %12, %14 : vector<16x32xf32>
      %c0_14 = arith.constant 0 : index
      %c0_15 = arith.constant 0 : index
      %16 = vector.load %arg6[%c0_14, %c0_15] : memref<16x32xf32, #tpu.memory_space<vmem>>, vector<16x32xf32>
      tpu.vector_store %arg6[%c0_14, %c0_15], %15 {strides = array<i32>} : memref<16x32xf32, #tpu.memory_space<vmem>>, vector<16x32xf32>,
    } else {
    }
    return
  }
  func.func @transform_0(%arg0: i32, %arg1: i32, %arg2: i32) -> (i32, i32) {
    %c0_i32 = arith.constant 0 : i32
    return %arg0, %arg2 : i32, i32
  }
  func.func @transform_1(%arg0: i32, %arg1: i32, %arg2: i32) -> (i32, i32) {
    %c0_i32 = arith.constant 0 : i32
    return %arg2, %arg1 : i32, i32
  }
  func.func @transform_2(%arg0: i32, %arg1: i32, %arg2: i32) -> (i32, i32) {
    %c0_i32 = arith.constant 0 : i32
    %c0_i32_0 = arith.constant 0 : i32
    return %c0_i32, %arg1 : i32, i32
  }
  func.func @transform_3(%arg0: i32, %arg1: i32, %arg2: i32) -> (i32, i32) {
    %c0_i32 = arith.constant 0 : i32
    return %arg0, %arg1 : i32, i32
  }
}

module attributes {stable_mosaic.version = 11 : i64} {
  func.func @_add_layernorm_kernel(%arg0: i32, %arg1: memref<16x32xf32, #tpu.memory_space<vmem>>, %arg2: memref<16x32xf32, #tpu.memory_space<vmem>>, %arg3: memref<1x32xf32, #tpu.memory_space<vmem>>, %arg4: memref<1x32xf32, #tpu.memory_space<vmem>>, %arg5: memref<16x32xf32, #tpu.memory_space<vmem>>) attributes {dimension_semantics = [#tpu.dimension_semantics<parallel>], iteration_bounds = array<i64: 1>, scalar_prefetch = 0 : i64, scratch_operands = 0 : i64, tpu.core_type = #tpu.core_type<tc>, window_params = [{transform_indices = @transform_0, window_bounds = array<i64: 16, 32>}, {transform_indices = @transform_1, window_bounds = array<i64: 16, 32>}, {pipeline_mode = #tpu.pipeline_mode<synchronous>, transform_indices = @transform_2, window_bounds = array<i64: 1, 32>}, {pipeline_mode = #tpu.pipeline_mode<synchronous>, transform_indices = @transform_3, window_bounds = array<i64: 1, 32>}, {transform_indices = @transform_4, window_bounds = array<i64: 16, 32>}]} {
    %c0 = arith.constant 0 : index
    %c0_0 = arith.constant 0 : index
    %0 = vector.load %arg1[%c0, %c0_0] : memref<16x32xf32, #tpu.memory_space<vmem>>, vector<16x32xf32>
    %c0_1 = arith.constant 0 : index
    %c0_2 = arith.constant 0 : index
    %1 = vector.load %arg2[%c0_1, %c0_2] : memref<16x32xf32, #tpu.memory_space<vmem>>, vector<16x32xf32>
    %2 = arith.addf %0, %1 : vector<16x32xf32>
    %cst = arith.constant dense<0.000000e+00> : vector<16xf32>
    %3 = vector.multi_reduction <add>, %2, %cst [1] : vector<16x32xf32> to vector<16xf32>
    %4 = vector.shape_cast %3 : vector<16xf32> to vector<16x1xf32>
    %cst_3 = arith.constant 3.200000e+01 : f32
    %5 = vector.broadcast %cst_3 : f32 to vector<16x1xf32>
    %6 = arith.divf %4, %5 : vector<16x1xf32>
    %7 = vector.broadcast %6 : vector<16x1xf32> to vector<16x32xf32>
    %8 = arith.subf %2, %7 : vector<16x32xf32>
    %9 = arith.mulf %8, %8 : vector<16x32xf32>
    %cst_4 = arith.constant dense<0.000000e+00> : vector<16xf32>
    %10 = vector.multi_reduction <add>, %9, %cst_4 [1] : vector<16x32xf32> to vector<16xf32>
    %11 = vector.shape_cast %10 : vector<16xf32> to vector<16x1xf32>
    %cst_5 = arith.constant 3.200000e+01 : f32
    %12 = vector.broadcast %cst_5 : f32 to vector<16x1xf32>
    %13 = arith.divf %11, %12 : vector<16x1xf32>
    %14 = vector.broadcast %6 : vector<16x1xf32> to vector<16x32xf32>
    %15 = arith.subf %2, %14 : vector<16x32xf32>
    %cst_6 = arith.constant 9.99999974E-6 : f32
    %16 = vector.broadcast %cst_6 : f32 to vector<16x1xf32>
    %17 = arith.addf %13, %16 : vector<16x1xf32>
    %18 = math.rsqrt %17 : vector<16x1xf32>
    %19 = vector.broadcast %18 : vector<16x1xf32> to vector<16x32xf32>
    %20 = arith.mulf %15, %19 : vector<16x32xf32>
    %c0_7 = arith.constant 0 : index
    %c0_8 = arith.constant 0 : index
    %21 = vector.load %arg3[%c0_7, %c0_8] : memref<1x32xf32, #tpu.memory_space<vmem>>, vector<1x32xf32>
    %22 = vector.broadcast %21 : vector<1x32xf32> to vector<16x32xf32>
    %23 = arith.mulf %20, %22 : vector<16x32xf32>
    %c0_9 = arith.constant 0 : index
    %c0_10 = arith.constant 0 : index
    %24 = vector.load %arg4[%c0_9, %c0_10] : memref<1x32xf32, #tpu.memory_space<vmem>>, vector<1x32xf32>
    %25 = vector.broadcast %24 : vector<1x32xf32> to vector<16x32xf32>
    %26 = arith.addf %23, %25 : vector<16x32xf32>
    %c0_11 = arith.constant 0 : index
    %c0_12 = arith.constant 0 : index
    %27 = vector.load %arg5[%c0_11, %c0_12] : memref<16x32xf32, #tpu.memory_space<vmem>>, vector<16x32xf32>
    tpu.vector_store %arg5[%c0_11, %c0_12], %26 {strides = array<i32>} : memref<16x32xf32, #tpu.memory_space<vmem>>, vector<16x32xf32>,
    return
  }
  func.func @transform_0(%arg0: i32) -> (i32, i32) {
    %c0_i32 = arith.constant 0 : i32
    %c0_i32_0 = arith.constant 0 : i32
    return %arg0, %c0_i32 : i32, i32
  }
  func.func @transform_1(%arg0: i32) -> (i32, i32) {
    %c0_i32 = arith.constant 0 : i32
    %c0_i32_0 = arith.constant 0 : i32
    return %arg0, %c0_i32 : i32, i32
  }
  func.func @transform_2(%arg0: i32) -> (i32, i32) {
    %c0_i32 = arith.constant 0 : i32
    %c0_i32_0 = arith.constant 0 : i32
    %c0_i32_1 = arith.constant 0 : i32
    return %c0_i32, %c0_i32_0 : i32, i32
  }
  func.func @transform_3(%arg0: i32) -> (i32, i32) {
    %c0_i32 = arith.constant 0 : i32
    %c0_i32_0 = arith.constant 0 : i32
    %c0_i32_1 = arith.constant 0 : i32
    return %c0_i32, %c0_i32_0 : i32, i32
  }
  func.func @transform_4(%arg0: i32) -> (i32, i32) {
    %c0_i32 = arith.constant 0 : i32
    %c0_i32_0 = arith.constant 0 : i32
    return %arg0, %c0_i32 : i32, i32
  }
}

module attributes {stable_mosaic.version = 11 : i64} {
  func.func @_linear_kernel(%arg0: i32, %arg1: i32, %arg2: i32, %arg3: memref<16x32xf32, #tpu.memory_space<vmem>>, %arg4: memref<32x64xbf16, #tpu.memory_space<vmem>>, %arg5: memref<1x64xf32, #tpu.memory_space<vmem>>, %arg6: memref<16x64xbf16, #tpu.memory_space<vmem>>, %arg7: memref<16x64xf32, #tpu.memory_space<vmem>>) attributes {dimension_semantics = [#tpu.dimension_semantics<parallel>, #tpu.dimension_semantics<parallel>, #tpu.dimension_semantics<arbitrary>], iteration_bounds = array<i64: 1, 1, 1>, scalar_prefetch = 0 : i64, scratch_operands = 1 : i64, tpu.core_type = #tpu.core_type<tc>, window_params = [{transform_indices = @transform_0, window_bounds = array<i64: 16, 32>}, {transform_indices = @transform_1, window_bounds = array<i64: 32, 64>}, {transform_indices = @transform_2, window_bounds = array<i64: 1, 64>}, {transform_indices = @transform_3, window_bounds = array<i64: 16, 64>}]} {
    %c0_i32 = arith.constant 0 : i32
    %0 = arith.cmpi eq, %arg2, %c0_i32 : i32
    %1 = arith.extui %0 : i1 to i32
    %c0_i32_0 = arith.constant 0 : i32
    %2 = arith.cmpi ne, %1, %c0_i32_0 : i32
    scf.if %2 {
      %cst_10 = arith.constant 0.000000e+00 : f32
      %13 = vector.broadcast %cst_10 : f32 to vector<16x64xf32>
      %c0_11 = arith.constant 0 : index
      %c0_12 = arith.constant 0 : index
      %14 = vector.load %arg7[%c0_11, %c0_12] : memref<16x64xf32, #tpu.memory_space<vmem>>, vector<16x64xf32>
      tpu.vector_store %arg7[%c0_11, %c0_12], %13 {strides = array<i32>} : memref<16x64xf32, #tpu.memory_space<vmem>>, vector<16x64xf32>,
    } else {
    }
    %c0 = arith.constant 0 : index
    %c0_1 = arith.constant 0 : index
    %3 = vector.load %arg7[%c0, %c0_1] : memref<16x64xf32, #tpu.memory_space<vmem>>, vector<16x64xf32>
    %c0_2 = arith.constant 0 : index
    %c0_3 = arith.constant 0 : index
    %4 = vector.load %arg3[%c0_2, %c0_3] : memref<16x32xf32, #tpu.memory_space<vmem>>, vector<16x32xf32>
    %5 = arith.truncf %4 : vector<16x32xf32> to vector<16x32xbf16>
    %c0_4 = arith.constant 0 : index
    %c0_5 = arith.constant 0 : index
    %6 = vector.load %arg4[%c0_4, %c0_5] : memref<32x64xbf16, #tpu.memory_space<vmem>>, vector<32x64xbf16>
    %cst = arith.constant dense<0.000000e+00> : vector<16x64xf32>
    %7 = tpu.matmul %5, %6, %cst {dimension_numbers = #tpu.dot_dimension_numbers<[1], [0], [0], [1], [0, 0, 1, 1], [], []>} : vector<16x32xbf16>, vector<32x64xbf16>, vector<16x64xf32> -> vector<16x64xf32>
    %8 = arith.addf %3, %7 : vector<16x64xf32>
    %c0_6 = arith.constant 0 : index
    %c0_7 = arith.constant 0 : index
    %9 = vector.load %arg7[%c0_6, %c0_7] : memref<16x64xf32, #tpu.memory_space<vmem>>, vector<16x64xf32>
    tpu.vector_store %arg7[%c0_6, %c0_7], %8 {strides = array<i32>} : memref<16x64xf32, #tpu.memory_space<vmem>>, vector<16x64xf32>,
    %c0_i32_8 = arith.constant 0 : i32
    %10 = arith.cmpi eq, %arg2, %c0_i32_8 : i32
    %11 = arith.extui %10 : i1 to i32
    %c0_i32_9 = arith.constant 0 : i32
    %12 = arith.cmpi ne, %11, %c0_i32_9 : i32
    scf.if %12 {
      %c0_10 = arith.constant 0 : index
      %c0_11 = arith.constant 0 : index
      %13 = vector.load %arg7[%c0_10, %c0_11] : memref<16x64xf32, #tpu.memory_space<vmem>>, vector<16x64xf32>
      %c0_12 = arith.constant 0 : index
      %c0_13 = arith.constant 0 : index
      %14 = vector.load %arg5[%c0_12, %c0_13] : memref<1x64xf32, #tpu.memory_space<vmem>>, vector<1x64xf32>
      %15 = vector.broadcast %14 : vector<1x64xf32> to vector<16x64xf32>
      %16 = arith.addf %13, %15 : vector<16x64xf32>
      %cst_14 = arith.constant 0.000000e+00 : f32
      %17 = vector.broadcast %cst_14 : f32 to vector<16x64xf32>
      %18 = arith.maximumf %16, %17 : vector<16x64xf32>
      %19 = arith.truncf %18 : vector<16x64xf32> to vector<16x64xbf16>
      %c0_15 = arith.constant 0 : index
      %c0_16 = arith.constant 0 : index
      %20 = vector.load %arg6[%c0_15, %c0_16] : memref<16x64xbf16, #tpu.memory_space<vmem>>, vector<16x64xbf16>
      tpu.vector_store %arg6[%c0_15, %c0_16], %19 {strides = array<i32>} : memref<16x64xbf16, #tpu.memory_space<vmem>>, vector<16x64xbf16>,
    } else {
    }
    return
  }
  func.func @transform_0(%arg0: i32, %arg1: i32, %arg2: i32) -> (i32, i32) {
    %c0_i32 = arith.constant 0 : i32
    return %arg0, %arg2 : i32, i32
  }
  func.func @transform_1(%arg0: i32, %arg1: i32, %arg2: i32) -> (i32, i32) {
    %c0_i32 = arith.constant 0 : i32
    return %arg2, %arg1 : i32, i32
  }
  func.func @transform_2(%arg0: i32, %arg1: i32, %arg2: i32) -> (i32, i32) {
    %c0_i32 = arith.constant 0 : i32
    %c0_i32_0 = arith.constant 0 : i32
    return %c0_i32, %arg1 : i32, i32
  }
  func.func @transform_3(%arg0: i32, %arg1: i32, %arg2: i32) -> (i32, i32) {
    %c0_i32 = arith.constant 0 : i32
    return %arg0, %arg1 : i32, i32
  }
}

module attributes {stable_mosaic.version = 11 : i64} {
  func.func @_linear_kernel(%arg0: i32, %arg1: i32, %arg2: i32, %arg3: memref<16x64xbf16, #tpu.memory_space<vmem>>, %arg4: memref<64x32xbf16, #tpu.memory_space<vmem>>, %arg5: memref<1x32xf32, #tpu.memory_space<vmem>>, %arg6: memref<16x32xf32, #tpu.memory_space<vmem>>, %arg7: memref<16x32xf32, #tpu.memory_space<vmem>>) attributes {dimension_semantics = [#tpu.dimension_semantics<parallel>, #tpu.dimension_semantics<parallel>, #tpu.dimension_semantics<arbitrary>], iteration_bounds = array<i64: 1, 1, 1>, scalar_prefetch = 0 : i64, scratch_operands = 1 : i64, tpu.core_type = #tpu.core_type<tc>, window_params = [{transform_indices = @transform_0, window_bounds = array<i64: 16, 64>}, {transform_indices = @transform_1, window_bounds = array<i64: 64, 32>}, {transform_indices = @transform_2, window_bounds = array<i64: 1, 32>}, {transform_indices = @transform_3, window_bounds = array<i64: 16, 32>}]} {
    %c0_i32 = arith.constant 0 : i32
    %0 = arith.cmpi eq, %arg2, %c0_i32 : i32
    %1 = arith.extui %0 : i1 to i32
    %c0_i32_0 = arith.constant 0 : i32
    %2 = arith.cmpi ne, %1, %c0_i32_0 : i32
    scf.if %2 {
      %cst_10 = arith.constant 0.000000e+00 : f32
      %12 = vector.broadcast %cst_10 : f32 to vector<16x32xf32>
      %c0_11 = arith.constant 0 : index
      %c0_12 = arith.constant 0 : index
      %13 = vector.load %arg7[%c0_11, %c0_12] : memref<16x32xf32, #tpu.memory_space<vmem>>, vector<16x32xf32>
      tpu.vector_store %arg7[%c0_11, %c0_12], %12 {strides = array<i32>} : memref<16x32xf32, #tpu.memory_space<vmem>>, vector<16x32xf32>,
    } else {
    }
    %c0 = arith.constant 0 : index
    %c0_1 = arith.constant 0 : index
    %3 = vector.load %arg7[%c0, %c0_1] : memref<16x32xf32, #tpu.memory_space<vmem>>, vector<16x32xf32>
    %c0_2 = arith.constant 0 : index
    %c0_3 = arith.constant 0 : index
    %4 = vector.load %arg3[%c0_2, %c0_3] : memref<16x64xbf16, #tpu.memory_space<vmem>>, vector<16x64xbf16>
    %c0_4 = arith.constant 0 : index
    %c0_5 = arith.constant 0 : index
    %5 = vector.load %arg4[%c0_4, %c0_5] : memref<64x32xbf16, #tpu.memory_space<vmem>>, vector<64x32xbf16>
    %cst = arith.constant dense<0.000000e+00> : vector<16x32xf32>
    %6 = tpu.matmul %4, %5, %cst {dimension_numbers = #tpu.dot_dimension_numbers<[1], [0], [0], [1], [0, 0, 1, 1], [], []>} : vector<16x64xbf16>, vector<64x32xbf16>, vector<16x32xf32> -> vector<16x32xf32>
    %7 = arith.addf %3, %6 : vector<16x32xf32>
    %c0_6 = arith.constant 0 : index
    %c0_7 = arith.constant 0 : index
    %8 = vector.load %arg7[%c0_6, %c0_7] : memref<16x32xf32, #tpu.memory_space<vmem>>, vector<16x32xf32>
    tpu.vector_store %arg7[%c0_6, %c0_7], %7 {strides = array<i32>} : memref<16x32xf32, #tpu.memory_space<vmem>>, vector<16x32xf32>,
    %c0_i32_8 = arith.constant 0 : i32
    %9 = arith.cmpi eq, %arg2, %c0_i32_8 : i32
    %10 = arith.extui %9 : i1 to i32
    %c0_i32_9 = arith.constant 0 : i32
    %11 = arith.cmpi ne, %10, %c0_i32_9 : i32
    scf.if %11 {
      %c0_10 = arith.constant 0 : index
      %c0_11 = arith.constant 0 : index
      %12 = vector.load %arg7[%c0_10, %c0_11] : memref<16x32xf32, #tpu.memory_space<vmem>>, vector<16x32xf32>
      %c0_12 = arith.constant 0 : index
      %c0_13 = arith.constant 0 : index
      %13 = vector.load %arg5[%c0_12, %c0_13] : memref<1x32xf32, #tpu.memory_space<vmem>>, vector<1x32xf32>
      %14 = vector.broadcast %13 : vector<1x32xf32> to vector<16x32xf32>
      %15 = arith.addf %12, %14 : vector<16x32xf32>
      %c0_14 = arith.constant 0 : index
      %c0_15 = arith.constant 0 : index
      %16 = vector.load %arg6[%c0_14, %c0_15] : memref<16x32xf32, #tpu.memory_space<vmem>>, vector<16x32xf32>
      tpu.vector_store %arg6[%c0_14, %c0_15], %15 {strides = array<i32>} : memref<16x32xf32, #tpu.memory_space<vmem>>, vector<16x32xf32>,
    } else {
    }
    return
  }
  func.func @transform_0(%arg0: i32, %arg1: i32, %arg2: i32) -> (i32, i32) {
    %c0_i32 = arith.constant 0 : i32
    return %arg0, %arg2 : i32, i32
  }
  func.func @transform_1(%arg0: i32, %arg1: i32, %arg2: i32) -> (i32, i32) {
    %c0_i32 = arith.constant 0 : i32
    return %arg2, %arg1 : i32, i32
  }
  func.func @transform_2(%arg0: i32, %arg1: i32, %arg2: i32) -> (i32, i32) {
    %c0_i32 = arith.constant 0 : i32
    %c0_i32_0 = arith.constant 0 : i32
    return %c0_i32, %arg1 : i32, i32
  }
  func.func @transform_3(%arg0: i32, %arg1: i32, %arg2: i32) -> (i32, i32) {
    %c0_i32 = arith.constant 0 : i32
    return %arg0, %arg1 : i32, i32
  }
}

module attributes {stable_mosaic.version = 11 : i64} {
  func.func @_add_layernorm_kernel(%arg0: i32, %arg1: memref<16x32xf32, #tpu.memory_space<vmem>>, %arg2: memref<16x32xf32, #tpu.memory_space<vmem>>, %arg3: memref<1x32xf32, #tpu.memory_space<vmem>>, %arg4: memref<1x32xf32, #tpu.memory_space<vmem>>, %arg5: memref<16x32xf32, #tpu.memory_space<vmem>>) attributes {dimension_semantics = [#tpu.dimension_semantics<parallel>], iteration_bounds = array<i64: 1>, scalar_prefetch = 0 : i64, scratch_operands = 0 : i64, tpu.core_type = #tpu.core_type<tc>, window_params = [{transform_indices = @transform_0, window_bounds = array<i64: 16, 32>}, {transform_indices = @transform_1, window_bounds = array<i64: 16, 32>}, {pipeline_mode = #tpu.pipeline_mode<synchronous>, transform_indices = @transform_2, window_bounds = array<i64: 1, 32>}, {pipeline_mode = #tpu.pipeline_mode<synchronous>, transform_indices = @transform_3, window_bounds = array<i64: 1, 32>}, {transform_indices = @transform_4, window_bounds = array<i64: 16, 32>}]} {
    %c0 = arith.constant 0 : index
    %c0_0 = arith.constant 0 : index
    %0 = vector.load %arg1[%c0, %c0_0] : memref<16x32xf32, #tpu.memory_space<vmem>>, vector<16x32xf32>
    %c0_1 = arith.constant 0 : index
    %c0_2 = arith.constant 0 : index
    %1 = vector.load %arg2[%c0_1, %c0_2] : memref<16x32xf32, #tpu.memory_space<vmem>>, vector<16x32xf32>
    %2 = arith.addf %0, %1 : vector<16x32xf32>
    %cst = arith.constant dense<0.000000e+00> : vector<16xf32>
    %3 = vector.multi_reduction <add>, %2, %cst [1] : vector<16x32xf32> to vector<16xf32>
    %4 = vector.shape_cast %3 : vector<16xf32> to vector<16x1xf32>
    %cst_3 = arith.constant 3.200000e+01 : f32
    %5 = vector.broadcast %cst_3 : f32 to vector<16x1xf32>
    %6 = arith.divf %4, %5 : vector<16x1xf32>
    %7 = vector.broadcast %6 : vector<16x1xf32> to vector<16x32xf32>
    %8 = arith.subf %2, %7 : vector<16x32xf32>
    %9 = arith.mulf %8, %8 : vector<16x32xf32>
    %cst_4 = arith.constant dense<0.000000e+00> : vector<16xf32>
    %10 = vector.multi_reduction <add>, %9, %cst_4 [1] : vector<16x32xf32> to vector<16xf32>
    %11 = vector.shape_cast %10 : vector<16xf32> to vector<16x1xf32>
    %cst_5 = arith.constant 3.200000e+01 : f32
    %12 = vector.broadcast %cst_5 : f32 to vector<16x1xf32>
    %13 = arith.divf %11, %12 : vector<16x1xf32>
    %14 = vector.broadcast %6 : vector<16x1xf32> to vector<16x32xf32>
    %15 = arith.subf %2, %14 : vector<16x32xf32>
    %cst_6 = arith.constant 9.99999974E-6 : f32
    %16 = vector.broadcast %cst_6 : f32 to vector<16x1xf32>
    %17 = arith.addf %13, %16 : vector<16x1xf32>
    %18 = math.rsqrt %17 : vector<16x1xf32>
    %19 = vector.broadcast %18 : vector<16x1xf32> to vector<16x32xf32>
    %20 = arith.mulf %15, %19 : vector<16x32xf32>
    %c0_7 = arith.constant 0 : index
    %c0_8 = arith.constant 0 : index
    %21 = vector.load %arg3[%c0_7, %c0_8] : memref<1x32xf32, #tpu.memory_space<vmem>>, vector<1x32xf32>
    %22 = vector.broadcast %21 : vector<1x32xf32> to vector<16x32xf32>
    %23 = arith.mulf %20, %22 : vector<16x32xf32>
    %c0_9 = arith.constant 0 : index
    %c0_10 = arith.constant 0 : index
    %24 = vector.load %arg4[%c0_9, %c0_10] : memref<1x32xf32, #tpu.memory_space<vmem>>, vector<1x32xf32>
    %25 = vector.broadcast %24 : vector<1x32xf32> to vector<16x32xf32>
    %26 = arith.addf %23, %25 : vector<16x32xf32>
    %c0_11 = arith.constant 0 : index
    %c0_12 = arith.constant 0 : index
    %27 = vector.load %arg5[%c0_11, %c0_12] : memref<16x32xf32, #tpu.memory_space<vmem>>, vector<16x32xf32>
    tpu.vector_store %arg5[%c0_11, %c0_12], %26 {strides = array<i32>} : memref<16x32xf32, #tpu.memory_space<vmem>>, vector<16x32xf32>,
    return
  }
  func.func @transform_0(%arg0: i32) -> (i32, i32) {
    %c0_i32 = arith.constant 0 : i32
    %c0_i32_0 = arith.constant 0 : i32
    return %arg0, %c0_i32 : i32, i32
  }
  func.func @transform_1(%arg0: i32) -> (i32, i32) {
    %c0_i32 = arith.constant 0 : i32
    %c0_i32_0 = arith.constant 0 : i32
    return %arg0, %c0_i32 : i32, i32
  }
  func.func @transform_2(%arg0: i32) -> (i32, i32) {
    %c0_i32 = arith.constant 0 : i32
    %c0_i32_0 = arith.constant 0 : i32
    %c0_i32_1 = arith.constant 0 : i32
    return %c0_i32, %c0_i32_0 : i32, i32
  }
  func.func @transform_3(%arg0: i32) -> (i32, i32) {
    %c0_i32 = arith.constant 0 : i32
    %c0_i32_0 = arith.constant 0 : i32
    %c0_i32_1 = arith.constant 0 : i32
    return %c0_i32, %c0_i32_0 : i32, i32
  }
  func.func @transform_4(%arg0: i32) -> (i32, i32) {
    %c0_i32 = arith.constant 0 : i32
    %c0_i32_0 = arith.constant 0 : i32
    return %arg0, %c0_i32 : i32, i32
  }
}

</mosaic_0001>

<llo_original>
// kernel: encoder_forward.14
$region0: #{encoder_forward.14}
  #allocation0 [shape = 'u32[]', space=smem, size = 0x4, offset = 0x4, fixed_abs, tag = 'smem constant byte address 0x4 - core index']
  #allocation1 [shape = 'u32[144,128]{1,0:T(1,128)}', space=vmem, size = 0x12000, scoped, tag = 'internal scratch']
  #allocation2 [shape = 'f32[16,96]{1,0:T(8,128)}', space=vmem, size = 0x2000, scoped, tag = 'scratch operand']
  %s0 = inlined_call_operand.vmem [shape: f32[16,32], index: 0, kind: input, shape index: {}]
  %s1 = inlined_call_operand.vmem [shape: bf16[32,96], index: 1, kind: input, shape index: {}]
  %s2 = inlined_call_operand.vmem [shape: f32[1,96], index: 2, kind: input, shape index: {}]
  %s3 = inlined_call_operand.vmem [shape: bf16[16,96], index: 3, kind: output, shape index: {}]
  %s4 = sld [smem:[#allocation0]]
  $region30: #{encoder_forward.14} parent=0
    _
  %s6 = ssub.s32 1, %s4
  %s7 = scalar_select 0, %s6, %s4
  // Predicated region
  $region2: #{encoder_forward.14} parent=0 // pred_check
    _
  $region3: #{encoder_forward.14} parent=0 // pred_check_branch
    %9 = sbr.rel (0) target = $region5
  $region4: #{encoder_forward.14} parent=0 // pred_region
    _
  $region5: #{encoder_forward.14} parent=0 // pred_fallthru
    _
  // Predicated region
  $region6: #{encoder_forward.14} parent=0 // pred_check
    _
  $region7: #{encoder_forward.14} parent=0 // pred_check_branch
    %11 = sbr.rel (0) target = $region9
  $region8: #{encoder_forward.14} parent=0 // pred_region
    _
  $region9: #{encoder_forward.14} parent=0 // pred_fallthru
    _
  // Predicated region
  $region10: #{encoder_forward.14} parent=0 // pred_check
    _
  $region11: #{encoder_forward.14} parent=0 // pred_check_branch
    %13 = sbr.rel (0) target = $region13
  $region12: #{encoder_forward.14} parent=0 // pred_region
    _
  $region13: #{encoder_forward.14} parent=0 // pred_fallthru
    _
  %p15 = scmp.eq.s32.totalorder 0, 0
  // Predicated region
  $region14: #{encoder_forward.14} parent=0 // pred_check
    %p16 = pneg %p15
  $region15: #{encoder_forward.14} parent=0 // pred_check_branch
    %18 = sbr.rel (%p16) target = $region17
  $region16: #{encoder_forward.14} parent=0 // pred_region
    %vm19 = vcmask 785408
    %20 = vst.msk [vmem:[#allocation2] sm:$0xff] %vm19, 0.0
    %21 = vst.msk [vmem:[#allocation2 + $0x8] sm:$0xff] %vm19, 0.0
  $region17: #{encoder_forward.14} parent=0 // pred_fallthru
    _
  %v22 = vld [vmem:[#allocation2] sm:$0xff]
  %v23 = vld [vmem:[#allocation2 + $0x8] sm:$0xff]
  %v24 = vld [vmem:[%s0] sm:$0xff]
  %v25 = vld [vmem:[%s0 + $0x8] sm:$0xff]
  %v26 = vpack.c.bf16 %v25, %v24
  %v27 = vld [vmem:[%s1] sm:$0xf]
  %v28 = vld [vmem:[%s1 + $0x4] sm:$0xf]
  %v29 = vld [vmem:[%s1 + $0x8] sm:$0xf]
  %v30 = vld [vmem:[%s1 + $0xc] sm:$0xf]
  %v35 = vunpack.c.l.b16 %v27
  %v36 = vunpack.c.l.b16 %v28
  %v37 = vunpack.c.l.b16 %v29
  %v38 = vunpack.c.l.b16 %v30
  %v39 = vpack.c.b16 %v36, %v35
  %v40 = vpack.c.b16 %v38, %v37
  %vm43 = vcmask 261120
  %v45 = vsel %vm43, %v26, 0
  %47 = vmatprep.subr.bf16.mxu0 0
  %48 = vmatpush1.bf16.msra.mxu0 %v39
  %49 = vmatprep.subr.bf16.mxu0 0
  %50 = vmatpush1.bf16.msra.mxu0 %v40
  %51 = vmatprep.subr.bf16.mxu0 0
  %52 = vmatpush1.bf16.msra.mxu0 0
  %53 = vmatprep.subr.bf16.mxu0 0
  %54 = vmatpush1.bf16.msra.mxu0 0
  %55 = vmatprep.subr.bf16.mxu0 0
  %56 = vmatpush1.bf16.msra.mxu0 0
  %57 = vmatprep.subr.bf16.mxu0 0
  %58 = vmatpush1.bf16.msra.mxu0 0
  %59 = vmatprep.subr.bf16.mxu0 0
  %60 = vmatpush1.bf16.msra.mxu0 0
  %61 = vmatprep.subr.bf16.mxu0 0
  %62 = vmatpush1.bf16.msra.mxu0 0
  %63 = vmatprep.subr.bf16.mxu0 0
  %64 = vmatpush1.bf16.msra.mxu0 0
  %65 = vmatprep.subr.bf16.mxu0 0
  %66 = vmatpush1.bf16.msra.mxu0 0
  %67 = vmatprep.subr.bf16.mxu0 0
  %68 = vmatpush1.bf16.msra.mxu0 0
  %69 = vmatprep.subr.bf16.mxu0 0
  %70 = vmatpush1.bf16.msra.mxu0 0
  %71 = vmatprep.subr.bf16.mxu0 0
  %72 = vmatpush1.bf16.msra.mxu0 0
  %73 = vmatprep.subr.bf16.mxu0 0
  %74 = vmatpush1.bf16.msra.mxu0 0
  %75 = vmatprep.subr.bf16.mxu0 0
  %76 = vmatpush1.bf16.msra.mxu0 0
  %77 = vmatprep.subr.bf16.mxu0 0
  %78 = vmatpush1.bf16.msra.mxu0 0
  %79 = vmatprep.mubr.bf16.mxu0 0
  %80 = vmatmul.mubr.bf16.gmra.mrb[0].mxu0 %v45
  %v81 = vpop.f32.mrb[0].mxu0
  %v82 = vadd.f32 0.0, %v81
  %v83 = vpop.f32.mrb[0].mxu0
  %v84 = vpop.f32.mrb[0].mxu0
  %v85 = vadd.f32 0.0, %v84
  %v86 = vpop.f32.mrb[0].mxu0
  %87 = vdwg.mxu0
  %v88 = vadd.f32 %v22, %v82
  %v89 = vadd.f32 %v23, %v85
  %vm90 = vcmask 785408
  %91 = vst.msk [vmem:[#allocation2] sm:$0xff] %vm90, %v88
  %92 = vst.msk [vmem:[#allocation2 + $0x8] sm:$0xff] %vm90, %v89
  // Predicated region
  $region18: #{encoder_forward.14} parent=0 // pred_check
    %p93 = pneg %p15
  $region19: #{encoder_forward.14} parent=0 // pred_check_branch
    %95 = sbr.rel (%p93) target = $region21
  $region20: #{encoder_forward.14} parent=0 // pred_region
    %v96 = vld [vmem:[#allocation2] sm:$0xff]
    %v97 = vld [vmem:[#allocation2 + $0x8] sm:$0xff]
    %v98 = vld [vmem:[%s2] sm:$0x1]
    %v100 = vlaneseq
    %v101 = vshrl.u32 %v100, 7
    %v102 = vsub.s32 0, %v101
    %v103 = vrot.slane %v98, %v102
    %v105 = vadd.f32 %v96, %v103
    %v106 = vadd.f32 %v97, %v103
    %v107 = vpack.c.bf16 %v106, %v105
    %v109 = vunpack.c.l.b16 %v107
    %v110 = vunpack.c.h.b16 %v107
    %v111 = vpack.c.b16 %v109, %v109
    %v112 = vpack.c.b16 %v110, %v110
    %vm115 = vcmask 781312
    %116 = vst.msk [vmem:[%s3] sm:$0xf] %vm115, %v111
    %117 = vst.msk [vmem:[%s3 + $0x4] sm:$0xf] %vm115, %v112
  $region21: #{encoder_forward.14} parent=0 // pred_fallthru
    _
  // Predicated region
  $region22: #{encoder_forward.14} parent=0 // pred_check
    _
  $region23: #{encoder_forward.14} parent=0 // pred_check_branch
    %119 = sbr.rel (0) target = $region25
  $region24: #{encoder_forward.14} parent=0 // pred_region
    _
  $region25: #{encoder_forward.14} parent=0 // pred_fallthru
    _
  // Predicated region
  $region26: #{encoder_forward.14} parent=0 // pred_check
    _
  $region27: #{encoder_forward.14} parent=0 // pred_check_branch
    %121 = sbr.rel (0) target = $region29
  $region28: #{encoder_forward.14} parent=0 // pred_region
    _
  $region29: #{encoder_forward.14} parent=0 // pred_fallthru
    _

// kernel: encoder_forward.16
$region0: #{encoder_forward.16}
  #allocation0 [shape = 'u32[]', space=smem, size = 0x4, offset = 0x4, fixed_abs, tag = 'smem constant byte address 0x4 - core index']
  #allocation1 [shape = 'u32[144,128]{1,0:T(1,128)}', space=vmem, size = 0x12000, scoped, tag = 'internal scratch']
  #allocation2 [shape = 'f32[16,32]{1,0:T(8,128)}', space=vmem, size = 0x2000, scoped, tag = 'scratch operand']
  %s0 = inlined_call_operand.vmem [shape: bf16[16,32], index: 0, kind: input, shape index: {}]
  %s1 = inlined_call_operand.vmem [shape: bf16[32,32], index: 1, kind: input, shape index: {}]
  %s2 = inlined_call_operand.vmem [shape: f32[1,32], index: 2, kind: input, shape index: {}]
  %s3 = inlined_call_operand.vmem [shape: f32[16,32], index: 3, kind: output, shape index: {}]
  %s4 = sld [smem:[#allocation0]]
  $region30: #{encoder_forward.16} parent=0
    _
  %s6 = ssub.s32 1, %s4
  %s7 = scalar_select 0, %s6, %s4
  // Predicated region
  $region2: #{encoder_forward.16} parent=0 // pred_check
    _
  $region3: #{encoder_forward.16} parent=0 // pred_check_branch
    %9 = sbr.rel (0) target = $region5
  $region4: #{encoder_forward.16} parent=0 // pred_region
    _
  $region5: #{encoder_forward.16} parent=0 // pred_fallthru
    _
  // Predicated region
  $region6: #{encoder_forward.16} parent=0 // pred_check
    _
  $region7: #{encoder_forward.16} parent=0 // pred_check_branch
    %11 = sbr.rel (0) target = $region9
  $region8: #{encoder_forward.16} parent=0 // pred_region
    _
  $region9: #{encoder_forward.16} parent=0 // pred_fallthru
    _
  // Predicated region
  $region10: #{encoder_forward.16} parent=0 // pred_check
    _
  $region11: #{encoder_forward.16} parent=0 // pred_check_branch
    %13 = sbr.rel (0) target = $region13
  $region12: #{encoder_forward.16} parent=0 // pred_region
    _
  $region13: #{encoder_forward.16} parent=0 // pred_fallthru
    _
  %p15 = scmp.eq.s32.totalorder 0, 0
  // Predicated region
  $region14: #{encoder_forward.16} parent=0 // pred_check
    %p16 = pneg %p15
  $region15: #{encoder_forward.16} parent=0 // pred_check_branch
    %18 = sbr.rel (%p16) target = $region17
  $region16: #{encoder_forward.16} parent=0 // pred_region
    %vm19 = vcmask 261120
    %20 = vst.msk [vmem:[#allocation2] sm:$0xff] %vm19, 0.0
    %21 = vst.msk [vmem:[#allocation2 + $0x8] sm:$0xff] %vm19, 0.0
  $region17: #{encoder_forward.16} parent=0 // pred_fallthru
    _
  %v22 = vld [vmem:[#allocation2] sm:$0xff]
  %v23 = vld [vmem:[#allocation2 + $0x8] sm:$0xff]
  %v24 = vld [vmem:[%s0] sm:$0xf]
  %v25 = vld [vmem:[%s0 + $0x4] sm:$0xf]
  %v26 = vld [vmem:[%s1] sm:$0xf]
  %v27 = vld [vmem:[%s1 + $0x4] sm:$0xf]
  %v28 = vld [vmem:[%s1 + $0x8] sm:$0xf]
  %v29 = vld [vmem:[%s1 + $0xc] sm:$0xf]
  %v32 = vunpack.c.l.b16 %v24
  %v33 = vunpack.c.l.b16 %v25
  %v34 = vpack.c.b16 %v33, %v32
  %v39 = vunpack.c.l.b16 %v26
  %v40 = vunpack.c.l.b16 %v27
  %v41 = vunpack.c.l.b16 %v28
  %v42 = vunpack.c.l.b16 %v29
  %v43 = vpack.c.b16 %v40, %v39
  %v44 = vpack.c.b16 %v42, %v41
  %vm47 = vcmask 261120
  %v49 = vsel %vm47, %v34, 0
  %51 = vmatprep.subr.bf16.mxu0 0
  %52 = vmatpush1.bf16.msra.mxu0 %v43
  %53 = vmatprep.subr.bf16.mxu0 0
  %54 = vmatpush1.bf16.msra.mxu0 %v44
  %55 = vmatprep.subr.bf16.mxu0 0
  %56 = vmatpush1.bf16.msra.mxu0 0
  %57 = vmatprep.subr.bf16.mxu0 0
  %58 = vmatpush1.bf16.msra.mxu0 0
  %59 = vmatprep.subr.bf16.mxu0 0
  %60 = vmatpush1.bf16.msra.mxu0 0
  %61 = vmatprep.subr.bf16.mxu0 0
  %62 = vmatpush1.bf16.msra.mxu0 0
  %63 = vmatprep.subr.bf16.mxu0 0
  %64 = vmatpush1.bf16.msra.mxu0 0
  %65 = vmatprep.subr.bf16.mxu0 0
  %66 = vmatpush1.bf16.msra.mxu0 0
  %67 = vmatprep.subr.bf16.mxu0 0
  %68 = vmatpush1.bf16.msra.mxu0 0
  %69 = vmatprep.subr.bf16.mxu0 0
  %70 = vmatpush1.bf16.msra.mxu0 0
  %71 = vmatprep.subr.bf16.mxu0 0
  %72 = vmatpush1.bf16.msra.mxu0 0
  %73 = vmatprep.subr.bf16.mxu0 0
  %74 = vmatpush1.bf16.msra.mxu0 0
  %75 = vmatprep.subr.bf16.mxu0 0
  %76 = vmatpush1.bf16.msra.mxu0 0
  %77 = vmatprep.subr.bf16.mxu0 0
  %78 = vmatpush1.bf16.msra.mxu0 0
  %79 = vmatprep.subr.bf16.mxu0 0
  %80 = vmatpush1.bf16.msra.mxu0 0
  %81 = vmatprep.subr.bf16.mxu0 0
  %82 = vmatpush1.bf16.msra.mxu0 0
  %83 = vmatprep.mubr.bf16.mxu0 0
  %84 = vmatmul.mubr.bf16.gmra.mrb[0].mxu0 %v49
  %v85 = vpop.f32.mrb[0].mxu0
  %v86 = vadd.f32 0.0, %v85
  %v87 = vpop.f32.mrb[0].mxu0
  %v88 = vpop.f32.mrb[0].mxu0
  %v89 = vadd.f32 0.0, %v88
  %v90 = vpop.f32.mrb[0].mxu0
  %91 = vdwg.mxu0
  %v92 = vadd.f32 %v22, %v86
  %v93 = vadd.f32 %v23, %v89
  %94 = vst.msk [vmem:[#allocation2] sm:$0xff] %vm47, %v92
  %95 = vst.msk [vmem:[#allocation2 + $0x8] sm:$0xff] %vm47, %v93
  // Predicated region
  $region18: #{encoder_forward.16} parent=0 // pred_check
    %p96 = pneg %p15
  $region19: #{encoder_forward.16} parent=0 // pred_check_branch
    %98 = sbr.rel (%p96) target = $region21
  $region20: #{encoder_forward.16} parent=0 // pred_region
    %v99 = vld [vmem:[#allocation2] sm:$0xff]
    %v100 = vld [vmem:[#allocation2 + $0x8] sm:$0xff]
    %v101 = vld [vmem:[%s2] sm:$0x1]
    %v103 = vlaneseq
    %v104 = vshrl.u32 %v103, 7
    %v105 = vsub.s32 0, %v104
    %v106 = vrot.slane %v101, %v105
    %v108 = vadd.f32 %v99, %v106
    %v109 = vadd.f32 %v100, %v106
    %110 = vst.msk [vmem:[%s3] sm:$0xff] %vm47, %v108
    %111 = vst.msk [vmem:[%s3 + $0x8] sm:$0xff] %vm47, %v109
  $region21: #{encoder_forward.16} parent=0 // pred_fallthru
    _
  // Predicated region
  $region22: #{encoder_forward.16} parent=0 // pred_check
    _
  $region23: #{encoder_forward.16} parent=0 // pred_check_branch
    %113 = sbr.rel (0) target = $region25
  $region24: #{encoder_forward.16} parent=0 // pred_region
    _
  $region25: #{encoder_forward.16} parent=0 // pred_fallthru
    _
  // Predicated region
  $region26: #{encoder_forward.16} parent=0 // pred_check
    _
  $region27: #{encoder_forward.16} parent=0 // pred_check_branch
    %115 = sbr.rel (0) target = $region29
  $region28: #{encoder_forward.16} parent=0 // pred_region
    _
  $region29: #{encoder_forward.16} parent=0 // pred_fallthru
    _

// kernel: encoder_forward.17
$region0: #{encoder_forward.17}
  #allocation0 [shape = 'u32[]', space=smem, size = 0x4, offset = 0x4, fixed_abs, tag = 'smem constant byte address 0x4 - core index']
  #allocation1 [shape = 'u32[144,128]{1,0:T(1,128)}', space=vmem, size = 0x12000, scoped, tag = 'internal scratch']
  %s0 = inlined_call_operand.vmem [shape: f32[16,32], index: 0, kind: input, shape index: {}]
  %s1 = inlined_call_operand.vmem [shape: f32[16,32], index: 1, kind: input, shape index: {}]
  %s2 = inlined_call_operand.vmem [shape: f32[1,32], index: 2, kind: input, shape index: {}]
  %s3 = inlined_call_operand.vmem [shape: f32[1,32], index: 3, kind: input, shape index: {}]
  %s4 = inlined_call_operand.vmem [shape: f32[16,32], index: 4, kind: output, shape index: {}]
  %s5 = sld [smem:[#allocation0]]
  $region26: #{encoder_forward.17} parent=0
    _
  %s7 = ssub.s32 1, %s5
  %s8 = scalar_select 0, %s7, %s5
  // Predicated region
  $region2: #{encoder_forward.17} parent=0 // pred_check
    _
  $region3: #{encoder_forward.17} parent=0 // pred_check_branch
    %10 = sbr.rel (0) target = $region5
  $region4: #{encoder_forward.17} parent=0 // pred_region
    _
  $region5: #{encoder_forward.17} parent=0 // pred_fallthru
    _
  // Predicated region
  $region6: #{encoder_forward.17} parent=0 // pred_check
    _
  $region7: #{encoder_forward.17} parent=0 // pred_check_branch
    %12 = sbr.rel (0) target = $region9
  $region8: #{encoder_forward.17} parent=0 // pred_region
    _
  $region9: #{encoder_forward.17} parent=0 // pred_fallthru
    _
  // Predicated region
  $region10: #{encoder_forward.17} parent=0 // pred_check
    _
  $region11: #{encoder_forward.17} parent=0 // pred_check_branch
    %14 = sbr.rel (0) target = $region13
  $region12: #{encoder_forward.17} parent=0 // pred_region
    _
  $region13: #{encoder_forward.17} parent=0 // pred_fallthru
    _
  // Predicated region
  $region14: #{encoder_forward.17} parent=0 // pred_check
    _
  $region15: #{encoder_forward.17} parent=0 // pred_check_branch
    %16 = sbr.rel (0) target = $region17
  $region16: #{encoder_forward.17} parent=0 // pred_region
    _
  $region17: #{encoder_forward.17} parent=0 // pred_fallthru
    _
  %v17 = vld [vmem:[%s0] sm:$0xff]
  %v18 = vld [vmem:[%s0 + $0x8] sm:$0xff]
  %v19 = vld [vmem:[%s1] sm:$0xff]
  %v20 = vld [vmem:[%s1 + $0x8] sm:$0xff]
  %v21 = vadd.f32 %v17, %v19
  %v22 = vadd.f32 %v18, %v20
  %vm23 = vcmask 261120
  %v24 = vsel %vm23, %v21, 0.0
  %25 = vadd.xlane.f32.xlu0 %v24
  %v26 = vpop.xlane.xlu0 %25
  %v27 = vsel %vm23, %v22, 0.0
  %28 = vadd.xlane.f32.xlu0 %v27
  %v29 = vpop.xlane.xlu0 %28
  %v30 = vrcp.pop 32.0
  %v31 = vmul.f32 %v26, %v30
  %v32 = vmul.f32 %v29, %v30
  %v33 = vsub.f32 %v21, %v31
  %v34 = vsub.f32 %v22, %v32
  %v35 = vmul.f32 %v33, %v33
  %v36 = vmul.f32 %v34, %v34
  %v37 = vsel %vm23, %v35, 0.0
  %38 = vadd.xlane.f32.xlu0 %v37
  %v39 = vpop.xlane.xlu0 %38
  %v40 = vsel %vm23, %v36, 0.0
  %41 = vadd.xlane.f32.xlu0 %v40
  %v42 = vpop.xlane.xlu0 %41
  %v43 = vmul.f32 %v39, %v30
  %v44 = vmul.f32 %v42, %v30
  %v45 = vadd.f32 %v43, 1e-05
  %v46 = vadd.f32 %v44, 1e-05
  %v47 = vrsqrt.pop %v45
  %v48 = vrsqrt.pop %v46
  %v49 = vmul.f32 %v33, %v47
  %v50 = vmul.f32 %v34, %v48
  %v51 = vld [vmem:[%s2] sm:$0x1]
  %v53 = vlaneseq
  %v54 = vshrl.u32 %v53, 7
  %v55 = vsub.s32 0, %v54
  %v56 = vrot.slane %v51, %v55
  %v58 = vmul.f32 %v49, %v56
  %v59 = vmul.f32 %v50, %v56
  %v60 = vld [vmem:[%s3] sm:$0x1]
  %v62 = vlaneseq
  %v63 = vshrl.u32 %v62, 7
  %v64 = vsub.s32 0, %v63
  %v65 = vrot.slane %v60, %v64
  %v67 = vadd.f32 %v58, %v65
  %v68 = vadd.f32 %v59, %v65
  %69 = vst.msk [vmem:[%s4] sm:$0xff] %vm23, %v67
  %70 = vst.msk [vmem:[%s4 + $0x8] sm:$0xff] %vm23, %v68
  // Predicated region
  $region18: #{encoder_forward.17} parent=0 // pred_check
    _
  $region19: #{encoder_forward.17} parent=0 // pred_check_branch
    %72 = sbr.rel (0) target = $region21
  $region20: #{encoder_forward.17} parent=0 // pred_region
    _
  $region21: #{encoder_forward.17} parent=0 // pred_fallthru
    _
  // Predicated region
  $region22: #{encoder_forward.17} parent=0 // pred_check
    _
  $region23: #{encoder_forward.17} parent=0 // pred_check_branch
    %74 = sbr.rel (0) target = $region25
  $region24: #{encoder_forward.17} parent=0 // pred_region
    _
  $region25: #{encoder_forward.17} parent=0 // pred_fallthru
    _

// kernel: encoder_forward.15
$region0: #{encoder_forward.15}
  #allocation0 [shape = 'u32[]', space=smem, size = 0x4, offset = 0x4, fixed_abs, tag = 'smem constant byte address 0x4 - core index']
  #allocation1 [shape = 'u32[144,128]{1,0:T(1,128)}', space=vmem, size = 0x12000, scoped, tag = 'internal scratch']
  %s0 = inlined_call_operand.vmem [shape: bf16[2,4,8,8], index: 0, kind: input, shape index: {}]
  %s1 = inlined_call_operand.vmem [shape: bf16[2,4,8,8], index: 1, kind: input, shape index: {}]
  %s2 = inlined_call_operand.vmem [shape: bf16[2,4,8,8], index: 2, kind: input, shape index: {}]
  %s3 = inlined_call_operand.vmem [shape: bf16[2,8,8], index: 3, kind: input, shape index: {}]
  %s4 = inlined_call_operand.vmem [shape: bf16[2,4,8,8], index: 4, kind: output, shape index: {}]
  %s5 = sld [smem:[#allocation0]]
  $region49: #{encoder_forward.15} parent=0
    _
  %s7 = ssub.s32 1, %s5
  %s8 = scalar_select 0, %s7, %s5
  loop: start=0, step=1, limit=4
  $region2: #{encoder_forward.15} parent=0 // loop_pre_header
    _
  $region3: #{encoder_forward.15} parent=0 // loop_header
    %s10 = sphi 0, %s14
    %p11 = scmp.ge.s32.totalorder %s10, 4
    %s20 = sphi 0, %s22
    %s23 = sphi 0, %s20
    %s24 = sphi 0, %s23
    %s40 = sphi 0, %s24
    %s46 = sphi 0, %s48
    %s49 = sphi 0, %s46
    %s50 = sphi 0, %s49
    %s66 = sphi 0, %s50
    %s72 = sphi 0, %s74
    %s75 = sphi 0, %s72
    %s76 = sphi 0, %s75
    %s92 = sphi 0, %s76
    %s98 = sphi 0, %s100
    %s101 = sphi 0, %s98
    %s102 = sphi 0, %s101
    %s118 = sphi 0, %s102
    %s124 = sphi 0, %s126
    %s127 = sphi 0, %s124
    %s128 = sphi 0, %s127
    %s144 = sphi 0, %s128
  $region4: #{encoder_forward.15} parent=0 // loop_header_branch
    %13 = sbr.rel (%p11) target = $region8
  $region5: #{encoder_forward.15} parent=0 // loop_body
    %s15 = ssub.s32 %s10, 1
    %s16 = ssub.s32 %s10, 2
    %s17 = sadd.s32 %s10, 1
    %s18 = ssub.s32 %s10, %s17
    %p19 = scmp.eq.s32.totalorder %s18, 0
    %s21 = sadd.s32 %s20, 1
    %s22 = scalar_select %p19, %s20, %s21
    %p25 = pneg %p19
    %p26 = scmp.eq.s32.totalorder %s10, 1
    %p27 = por %p25, %p26
    %p28 = scmp.ne.s32.totalorder %s20, %s23
    %p29 = scmp.eq.s32.totalorder %s10, 0
    %p30 = por %p28, %p29
    %p31 = scmp.ne.s32.totalorder %s20, %s23
    %p32 = scmp.eq.s32.totalorder %s15, 1
    %p33 = por %p31, %p32
    %p34 = scmp.ne.s32.totalorder %s23, %s24
    %p35 = scmp.eq.s32.totalorder %s15, 0
    %p36 = por %p34, %p35
    %p37 = scmp.ne.s32.totalorder %s23, %s24
    %p38 = scmp.eq.s32.totalorder %s16, 1
    %p39 = por %p37, %p38
    %p41 = scmp.ne.s32.totalorder %s24, %s40
    %p42 = scmp.eq.s32.totalorder %s16, 0
    %p43 = por %p41, %p42
    %s44 = ssub.s32 %s10, %s17
    %p45 = scmp.eq.s32.totalorder %s44, 0
    %s47 = sadd.s32 %s46, 1
    %s48 = scalar_select %p45, %s46, %s47
    %p51 = pneg %p45
    %p52 = scmp.eq.s32.totalorder %s10, 1
    %p53 = por %p51, %p52
    %p54 = scmp.ne.s32.totalorder %s46, %s49
    %p55 = scmp.eq.s32.totalorder %s10, 0
    %p56 = por %p54, %p55
    %p57 = scmp.ne.s32.totalorder %s46, %s49
    %p58 = scmp.eq.s32.totalorder %s15, 1
    %p59 = por %p57, %p58
    %p60 = scmp.ne.s32.totalorder %s49, %s50
    %p61 = scmp.eq.s32.totalorder %s15, 0
    %p62 = por %p60, %p61
    %p63 = scmp.ne.s32.totalorder %s49, %s50
    %p64 = scmp.eq.s32.totalorder %s16, 1
    %p65 = por %p63, %p64
    %p67 = scmp.ne.s32.totalorder %s50, %s66
    %p68 = scmp.eq.s32.totalorder %s16, 0
    %p69 = por %p67, %p68
    %s70 = ssub.s32 %s10, %s17
    %p71 = scmp.eq.s32.totalorder %s70, 0
    %s73 = sadd.s32 %s72, 1
    %s74 = scalar_select %p71, %s72, %s73
    %p77 = pneg %p71
    %p78 = scmp.eq.s32.totalorder %s10, 1
    %p79 = por %p77, %p78
    %p80 = scmp.ne.s32.totalorder %s72, %s75
    %p81 = scmp.eq.s32.totalorder %s10, 0
    %p82 = por %p80, %p81
    %p83 = scmp.ne.s32.totalorder %s72, %s75
    %p84 = scmp.eq.s32.totalorder %s15, 1
    %p85 = por %p83, %p84
    %p86 = scmp.ne.s32.totalorder %s75, %s76
    %p87 = scmp.eq.s32.totalorder %s15, 0
    %p88 = por %p86, %p87
    %p89 = scmp.ne.s32.totalorder %s75, %s76
    %p90 = scmp.eq.s32.totalorder %s16, 1
    %p91 = por %p89, %p90
    %p93 = scmp.ne.s32.totalorder %s76, %s92
    %p94 = scmp.eq.s32.totalorder %s16, 0
    %p95 = por %p93, %p94
    %s96 = ssub.s32 %s10, %s17
    %p97 = scmp.eq.s32.totalorder %s96, 0
    %s99 = sadd.s32 %s98, 1
    %s100 = scalar_select %p97, %s98, %s99
    %p103 = pneg %p97
    %p104 = scmp.eq.s32.totalorder %s10, 1
    %p105 = por %p103, %p104
    %p106 = scmp.ne.s32.totalorder %s98, %s101
    %p107 = scmp.eq.s32.totalorder %s10, 0
    %p108 = por %p106, %p107
    %p109 = scmp.ne.s32.totalorder %s98, %s101
    %p110 = scmp.eq.s32.totalorder %s15, 1
    %p111 = por %p109, %p110
    %p112 = scmp.ne.s32.totalorder %s101, %s102
    %p113 = scmp.eq.s32.totalorder %s15, 0
    %p114 = por %p112, %p113
    %p115 = scmp.ne.s32.totalorder %s101, %s102
    %p116 = scmp.eq.s32.totalorder %s16, 1
    %p117 = por %p115, %p116
    %p119 = scmp.ne.s32.totalorder %s102, %s118
    %p120 = scmp.eq.s32.totalorder %s16, 0
    %p121 = por %p119, %p120
    %s122 = ssub.s32 %s10, %s17
    %p123 = scmp.eq.s32.totalorder %s122, 0
    %s125 = sadd.s32 %s124, 1
    %s126 = scalar_select %p123, %s124, %s125
    %p129 = pneg %p123
    %p130 = scmp.eq.s32.totalorder %s10, 1
    %p131 = por %p129, %p130
    %p132 = scmp.ne.s32.totalorder %s124, %s127
    %p133 = scmp.eq.s32.totalorder %s10, 0
    %p134 = por %p132, %p133
    %p135 = scmp.ne.s32.totalorder %s124, %s127
    %p136 = scmp.eq.s32.totalorder %s15, 1
    %p137 = por %p135, %p136
    %p138 = scmp.ne.s32.totalorder %s127, %s128
    %p139 = scmp.eq.s32.totalorder %s15, 0
    %p140 = por %p138, %p139
    %p141 = scmp.ne.s32.totalorder %s127, %s128
    %p142 = scmp.eq.s32.totalorder %s16, 1
    %p143 = por %p141, %p142
    %p145 = scmp.ne.s32.totalorder %s128, %s144
    %p146 = scmp.eq.s32.totalorder %s16, 0
    %p147 = por %p145, %p146
    %p148 = scmp.le.s32.totalorder 1, %s10
    %p149 = scmp.lt.s32.totalorder %s10, 3
    %p150 = pnand %p148, %p149
    %p151 = pneg %p150
    // Predicated region
    $region9: #{encoder_forward.15} parent=5 // pred_check
      _
    $region10: #{encoder_forward.15} parent=5 // pred_check_branch
      %153 = sbr.rel (%p150) target = $region12
    $region11: #{encoder_forward.15} parent=5 // pred_region
      %s154 = ssub.s32 %s10, 1
    $region12: #{encoder_forward.15} parent=5 // pred_fallthru
      _
    %p155 = scmp.lt.s32.totalorder %s10, 2
    // Predicated region
    $region13: #{encoder_forward.15} parent=5 // pred_check
      %p156 = pneg %p155
    $region14: #{encoder_forward.15} parent=5 // pred_check_branch
      %158 = sbr.rel (%p156) target = $region16
    $region15: #{encoder_forward.15} parent=5 // pred_region
      // Predicated region
      $region17: #{encoder_forward.15} parent=15 // pred_check
        %p159 = pneg %p30
      $region18: #{encoder_forward.15} parent=15 // pred_check_branch
        %161 = sbr.rel (%p159) target = $region20
      $region19: #{encoder_forward.15} parent=15 // pred_region
        %p162 = scmp.lt.s32.totalorder %s10, 1
        %s163 = scalar_select %p162, %s10, 1
        %s164 = smul.addr %s163, 4
        %s165 = smul.addr %s164, 4
        %s166 = scalar_lea.vmem %s0, %s165
      $region20: #{encoder_forward.15} parent=15 // pred_fallthru
        _
      // Predicated region
      $region21: #{encoder_forward.15} parent=15 // pred_check
        %p167 = pneg %p56
      $region22: #{encoder_forward.15} parent=15 // pred_check_branch
        %169 = sbr.rel (%p167) target = $region24
      $region23: #{encoder_forward.15} parent=15 // pred_region
        %p170 = scmp.lt.s32.totalorder %s10, 1
        %s171 = scalar_select %p170, %s10, 1
        %s172 = smul.addr %s171, 4
        %s173 = smul.addr %s172, 4
        %s174 = scalar_lea.vmem %s1, %s173
      $region24: #{encoder_forward.15} parent=15 // pred_fallthru
        _
      // Predicated region
      $region25: #{encoder_forward.15} parent=15 // pred_check
        %p175 = pneg %p82
      $region26: #{encoder_forward.15} parent=15 // pred_check_branch
        %177 = sbr.rel (%p175) target = $region28
      $region27: #{encoder_forward.15} parent=15 // pred_region
        %p178 = scmp.lt.s32.totalorder %s10, 1
        %s179 = scalar_select %p178, %s10, 1
        %s180 = smul.addr %s179, 4
        %s181 = smul.addr %s180, 4
        %s182 = scalar_lea.vmem %s2, %s181
      $region28: #{encoder_forward.15} parent=15 // pred_fallthru
        _
      // Predicated region
      $region29: #{encoder_forward.15} parent=15 // pred_check
        %p183 = pneg %p108
      $region30: #{encoder_forward.15} parent=15 // pred_check_branch
        %185 = sbr.rel (%p183) target = $region32
      $region31: #{encoder_forward.15} parent=15 // pred_region
        %p186 = scmp.lt.s32.totalorder %s10, 1
        %s187 = scalar_select %p186, %s10, 1
        %s188 = smul.addr %s187, 4
        %s189 = scalar_lea.vmem %s3, %s188
      $region32: #{encoder_forward.15} parent=15 // pred_fallthru
        _
    $region16: #{encoder_forward.15} parent=5 // pred_fallthru
      _
    %p190 = scmp.le.s32.totalorder 1, %s10
    %p191 = scmp.lt.s32.totalorder %s10, 3
    %p192 = pnand %p190, %p191
    %p193 = pneg %p192
    // Predicated region
    $region33: #{encoder_forward.15} parent=5 // pred_check
      _
    $region34: #{encoder_forward.15} parent=5 // pred_check_branch
      %195 = sbr.rel (%p192) target = $region36
    $region35: #{encoder_forward.15} parent=5 // pred_region
      %s196 = ssub.s32 %s10, 1
      %p197 = scmp.lt.s32.totalorder %s15, 1
      %s198 = scalar_select %p197, %s15, 1
      %s199 = smul.addr %s198, 4
      %s200 = smul.addr %s199, 4
      %s201 = scalar_lea.vmem %s0, %s200
      %p202 = pneg %p36
      %p203 = pneg %p33
      %p204 = scmp.lt.s32.totalorder %s15, 1
      %s205 = scalar_select %p204, %s15, 1
      %s206 = smul.addr %s205, 4
      %s207 = smul.addr %s206, 4
      %s208 = scalar_lea.vmem %s1, %s207
      %p209 = pneg %p62
      %p210 = pneg %p59
      %p211 = scmp.lt.s32.totalorder %s15, 1
      %s212 = scalar_select %p211, %s15, 1
      %s213 = smul.addr %s212, 4
      %s214 = smul.addr %s213, 4
      %s215 = scalar_lea.vmem %s2, %s214
      %p216 = pneg %p88
      %p217 = pneg %p85
      %p218 = scmp.lt.s32.totalorder %s15, 1
      %s219 = scalar_select %p218, %s15, 1
      %s220 = smul.addr %s219, 4
      %s221 = scalar_lea.vmem %s3, %s220
      %p222 = pneg %p114
      %p223 = pneg %p111
      %p224 = pneg %p140
      %p225 = pneg %p137
      %p226 = scmp.lt.s32.totalorder %s15, 1
      %s227 = scalar_select %p226, %s15, 1
      %s228 = smul.addr %s227, 4
      %s229 = smul.addr %s228, 4
      %s230 = scalar_lea.vmem %s4, %s229
      %p231 = scmp.lt.s32.totalorder %s15, 1
      %s232 = scalar_select %p231, %s15, 1
      %s233 = smul.addr %s232, 4
      %s234 = smul.addr %s233, 4
      %s235 = scalar_lea.vmem %s0, %s234
      %p236 = scmp.lt.s32.totalorder %s15, 1
      %s237 = scalar_select %p236, %s15, 1
      %s238 = smul.addr %s237, 4
      %s239 = smul.addr %s238, 4
      %s240 = scalar_lea.vmem %s1, %s239
      %p241 = scmp.lt.s32.totalorder %s15, 1
      %s242 = scalar_select %p241, %s15, 1
      %s243 = smul.addr %s242, 4
      %s244 = smul.addr %s243, 4
      %s245 = scalar_lea.vmem %s2, %s244
      %p246 = scmp.lt.s32.totalorder %s15, 1
      %s247 = scalar_select %p246, %s15, 1
      %s248 = smul.addr %s247, 4
      %s249 = scalar_lea.vmem %s3, %s248
      %p250 = scmp.lt.s32.totalorder %s15, 1
      %s251 = scalar_select %p250, %s15, 1
      %s252 = smul.addr %s251, 4
      %s253 = smul.addr %s252, 4
      %s254 = scalar_lea.vmem %s4, %s253
      %v256 = vld [vmem:[%s235] sm:$0xf]
      %v257 = vld [vmem:[%s235 + $0x4] sm:$0xf]
      %v258 = vld [vmem:[%s235 + $0x8] sm:$0xf]
      %v259 = vld [vmem:[%s235 + $0xc] sm:$0xf]
      %v260 = vld [vmem:[%s240] sm:$0xf]
      %v261 = vld [vmem:[%s240 + $0x4] sm:$0xf]
      %v262 = vld [vmem:[%s240 + $0x8] sm:$0xf]
      %v263 = vld [vmem:[%s240 + $0xc] sm:$0xf]
      %v264 = vld [vmem:[%s245] sm:$0xf]
      %v265 = vld [vmem:[%s245 + $0x4] sm:$0xf]
      %v266 = vld [vmem:[%s245 + $0x8] sm:$0xf]
      %v267 = vld [vmem:[%s245 + $0xc] sm:$0xf]
      %v268 = vld [vmem:[%s249] sm:$0xf]
      %v269 = vunpack.c.l.bf16 %v268
      %vm270 = vcmask 64512
      %v272 = vsel %vm270, %v256, 0
      %v275 = vsel %vm270, %v260, 0
      %277 = vmatprep.subr.bf16.mxu0 0
      %278 = vmatpush1.bf16.xpose.msra.mxu0 %v275
      %279 = vmatprep.subr.bf16.mxu0 0
      %280 = vmatpush1.bf16.xpose.msra.mxu0 0
      %281 = vmatprep.subr.bf16.mxu0 0
      %282 = vmatpush1.bf16.xpose.msra.mxu0 0
      %283 = vmatprep.subr.bf16.mxu0 0
      %284 = vmatpush1.bf16.xpose.msra.mxu0 0
      %285 = vmatprep.subr.bf16.mxu0 0
      %286 = vmatpush1.bf16.xpose.msra.mxu0 0
      %287 = vmatprep.subr.bf16.mxu0 0
      %288 = vmatpush1.bf16.xpose.msra.mxu0 0
      %289 = vmatprep.subr.bf16.mxu0 0
      %290 = vmatpush1.bf16.xpose.msra.mxu0 0
      %291 = vmatprep.subr.bf16.mxu0 0
      %292 = vmatpush1.bf16.xpose.msra.mxu0 0
      %293 = vmatprep.subr.bf16.mxu0 0
      %294 = vmatpush1.bf16.xpose.msra.mxu0 0
      %295 = vmatprep.subr.bf16.mxu0 0
      %296 = vmatpush1.bf16.xpose.msra.mxu0 0
      %297 = vmatprep.subr.bf16.mxu0 0
      %298 = vmatpush1.bf16.xpose.msra.mxu0 0
      %299 = vmatprep.subr.bf16.mxu0 0
      %300 = vmatpush1.bf16.xpose.msra.mxu0 0
      %301 = vmatprep.subr.bf16.mxu0 0
      %302 = vmatpush1.bf16.xpose.msra.mxu0 0
      %303 = vmatprep.subr.bf16.mxu0 0
      %304 = vmatpush1.bf16.xpose.msra.mxu0 0
      %305 = vmatprep.subr.bf16.mxu0 0
      %306 = vmatpush1.bf16.xpose.msra.mxu0 0
      %307 = vmatprep.subr.bf16.mxu0 0
      %308 = vmatpush1.bf16.xpose.msra.mxu0 0
      %309 = vmatprep.mubr.bf16.mxu0 0
      %310 = vmatmul.mubr.bf16.gmra.mrb[0].mxu0 %v272
      %v311 = vpop.f32.mrb[0].mxu0
      %v312 = vadd.f32 0.0, %v311
      %v313 = vpop.f32.mrb[0].mxu0
      %v314 = vpop.f32.mrb[0].mxu0
      %v315 = vpop.f32.mrb[0].mxu0
      %316 = vdwg.mxu0
      %v318 = vsel %vm270, %v257, 0
      %v321 = vsel %vm270, %v261, 0
      %323 = vmatprep.subr.bf16.mxu0 0
      %324 = vmatpush1.bf16.xpose.msra.mxu0 %v321
      %325 = vmatprep.subr.bf16.mxu0 0
      %326 = vmatpush1.bf16.xpose.msra.mxu0 0
      %327 = vmatprep.subr.bf16.mxu0 0
      %328 = vmatpush1.bf16.xpose.msra.mxu0 0
      %329 = vmatprep.subr.bf16.mxu0 0
      %330 = vmatpush1.bf16.xpose.msra.mxu0 0
      %331 = vmatprep.subr.bf16.mxu0 0
      %332 = vmatpush1.bf16.xpose.msra.mxu0 0
      %333 = vmatprep.subr.bf16.mxu0 0
      %334 = vmatpush1.bf16.xpose.msra.mxu0 0
      %335 = vmatprep.subr.bf16.mxu0 0
      %336 = vmatpush1.bf16.xpose.msra.mxu0 0
      %337 = vmatprep.subr.bf16.mxu0 0
      %338 = vmatpush1.bf16.xpose.msra.mxu0 0
      %339 = vmatprep.subr.bf16.mxu0 0
      %340 = vmatpush1.bf16.xpose.msra.mxu0 0
      %341 = vmatprep.subr.bf16.mxu0 0
      %342 = vmatpush1.bf16.xpose.msra.mxu0 0
      %343 = vmatprep.subr.bf16.mxu0 0
      %344 = vmatpush1.bf16.xpose.msra.mxu0 0
      %345 = vmatprep.subr.bf16.mxu0 0
      %346 = vmatpush1.bf16.xpose.msra.mxu0 0
      %347 = vmatprep.subr.bf16.mxu0 0
      %348 = vmatpush1.bf16.xpose.msra.mxu0 0
      %349 = vmatprep.subr.bf16.mxu0 0
      %350 = vmatpush1.bf16.xpose.msra.mxu0 0
      %351 = vmatprep.subr.bf16.mxu0 0
      %352 = vmatpush1.bf16.xpose.msra.mxu0 0
      %353 = vmatprep.subr.bf16.mxu0 0
      %354 = vmatpush1.bf16.xpose.msra.mxu0 0
      %355 = vmatprep.mubr.bf16.mxu0 0
      %356 = vmatmul.mubr.bf16.gmra.mrb[0].mxu0 %v318
      %v357 = vpop.f32.mrb[0].mxu0
      %v358 = vadd.f32 0.0, %v357
      %v359 = vpop.f32.mrb[0].mxu0
      %v360 = vpop.f32.mrb[0].mxu0
      %v361 = vpop.f32.mrb[0].mxu0
      %362 = vdwg.mxu0
      %v364 = vsel %vm270, %v258, 0
      %v367 = vsel %vm270, %v262, 0
      %369 = vmatprep.subr.bf16.mxu0 0
      %370 = vmatpush1.bf16.xpose.msra.mxu0 %v367
      %371 = vmatprep.subr.bf16.mxu0 0
      %372 = vmatpush1.bf16.xpose.msra.mxu0 0
      %373 = vmatprep.subr.bf16.mxu0 0
      %374 = vmatpush1.bf16.xpose.msra.mxu0 0
      %375 = vmatprep.subr.bf16.mxu0 0
      %376 = vmatpush1.bf16.xpose.msra.mxu0 0
      %377 = vmatprep.subr.bf16.mxu0 0
      %378 = vmatpush1.bf16.xpose.msra.mxu0 0
      %379 = vmatprep.subr.bf16.mxu0 0
      %380 = vmatpush1.bf16.xpose.msra.mxu0 0
      %381 = vmatprep.subr.bf16.mxu0 0
      %382 = vmatpush1.bf16.xpose.msra.mxu0 0
      %383 = vmatprep.subr.bf16.mxu0 0
      %384 = vmatpush1.bf16.xpose.msra.mxu0 0
      %385 = vmatprep.subr.bf16.mxu0 0
      %386 = vmatpush1.bf16.xpose.msra.mxu0 0
      %387 = vmatprep.subr.bf16.mxu0 0
      %388 = vmatpush1.bf16.xpose.msra.mxu0 0
      %389 = vmatprep.subr.bf16.mxu0 0
      %390 = vmatpush1.bf16.xpose.msra.mxu0 0
      %391 = vmatprep.subr.bf16.mxu0 0
      %392 = vmatpush1.bf16.xpose.msra.mxu0 0
      %393 = vmatprep.subr.bf16.mxu0 0
      %394 = vmatpush1.bf16.xpose.msra.mxu0 0
      %395 = vmatprep.subr.bf16.mxu0 0
      %396 = vmatpush1.bf16.xpose.msra.mxu0 0
      %397 = vmatprep.subr.bf16.mxu0 0
      %398 = vmatpush1.bf16.xpose.msra.mxu0 0
      %399 = vmatprep.subr.bf16.mxu0 0
      %400 = vmatpush1.bf16.xpose.msra.mxu0 0
      %401 = vmatprep.mubr.bf16.mxu0 0
      %402 = vmatmul.mubr.bf16.gmra.mrb[0].mxu0 %v364
      %v403 = vpop.f32.mrb[0].mxu0
      %v404 = vadd.f32 0.0, %v403
      %v405 = vpop.f32.mrb[0].mxu0
      %v406 = vpop.f32.mrb[0].mxu0
      %v407 = vpop.f32.mrb[0].mxu0
      %408 = vdwg.mxu0
      %v410 = vsel %vm270, %v259, 0
      %v413 = vsel %vm270, %v263, 0
      %415 = vmatprep.subr.bf16.mxu0 0
      %416 = vmatpush1.bf16.xpose.msra.mxu0 %v413
      %417 = vmatprep.subr.bf16.mxu0 0
      %418 = vmatpush1.bf16.xpose.msra.mxu0 0
      %419 = vmatprep.subr.bf16.mxu0 0
      %420 = vmatpush1.bf16.xpose.msra.mxu0 0
      %421 = vmatprep.subr.bf16.mxu0 0
      %422 = vmatpush1.bf16.xpose.msra.mxu0 0
      %423 = vmatprep.subr.bf16.mxu0 0
      %424 = vmatpush1.bf16.xpose.msra.mxu0 0
      %425 = vmatprep.subr.bf16.mxu0 0
      %426 = vmatpush1.bf16.xpose.msra.mxu0 0
      %427 = vmatprep.subr.bf16.mxu0 0
      %428 = vmatpush1.bf16.xpose.msra.mxu0 0
      %429 = vmatprep.subr.bf16.mxu0 0
      %430 = vmatpush1.bf16.xpose.msra.mxu0 0
      %431 = vmatprep.subr.bf16.mxu0 0
      %432 = vmatpush1.bf16.xpose.msra.mxu0 0
      %433 = vmatprep.subr.bf16.mxu0 0
      %434 = vmatpush1.bf16.xpose.msra.mxu0 0
      %435 = vmatprep.subr.bf16.mxu0 0
      %436 = vmatpush1.bf16.xpose.msra.mxu0 0
      %437 = vmatprep.subr.bf16.mxu0 0
      %438 = vmatpush1.bf16.xpose.msra.mxu0 0
      %439 = vmatprep.subr.bf16.mxu0 0
      %440 = vmatpush1.bf16.xpose.msra.mxu0 0
      %441 = vmatprep.subr.bf16.mxu0 0
      %442 = vmatpush1.bf16.xpose.msra.mxu0 0
      %443 = vmatprep.subr.bf16.mxu0 0
      %444 = vmatpush1.bf16.xpose.msra.mxu0 0
      %445 = vmatprep.subr.bf16.mxu0 0
      %446 = vmatpush1.bf16.xpose.msra.mxu0 0
      %447 = vmatprep.mubr.bf16.mxu0 0
      %448 = vmatmul.mubr.bf16.gmra.mrb[0].mxu0 %v410
      %v449 = vpop.f32.mrb[0].mxu0
      %v450 = vadd.f32 0.0, %v449
      %v451 = vpop.f32.mrb[0].mxu0
      %v452 = vpop.f32.mrb[0].mxu0
      %v453 = vpop.f32.mrb[0].mxu0
      %454 = vdwg.mxu0
      %v455 = vmul.f32 %v312, 0.35355338
      %v456 = vmul.f32 %v358, 0.35355338
      %v457 = vmul.f32 %v404, 0.35355338
      %v458 = vmul.f32 %v450, 0.35355338
      %v459 = vadd.f32 %v455, %v269
      %v460 = vadd.f32 %v456, %v269
      %v461 = vadd.f32 %v457, %v269
      %v462 = vadd.f32 %v458, %v269
      %v463 = vsel %vm270, %v459, -inf
      %464 = vmax.xlane.f32.xlu0 %v463
      %v465 = vpop.xlane.xlu0 %464
      %v466 = vsel %vm270, %v460, -inf
      %467 = vmax.xlane.f32.xlu0 %v466
      %v468 = vpop.xlane.xlu0 %467
      %v469 = vsel %vm270, %v461, -inf
      %470 = vmax.xlane.f32.xlu0 %v469
      %v471 = vpop.xlane.xlu0 %470
      %v472 = vsel %vm270, %v462, -inf
      %473 = vmax.xlane.f32.xlu0 %v472
      %v474 = vpop.xlane.xlu0 %473
      %v475 = vsub.f32 %v459, %v465
      %v476 = vsub.f32 %v460, %v468
      %v477 = vsub.f32 %v461, %v471
      %v478 = vsub.f32 %v462, %v474
      %v479 = vmul.f32 %v475, 1.442695
      %v480 = vpow.pop %v479
      %v481 = vmul.f32 %v476, 1.442695
      %v482 = vpow.pop %v481
      %v483 = vmul.f32 %v477, 1.442695
      %v484 = vpow.pop %v483
      %v485 = vmul.f32 %v478, 1.442695
      %v486 = vpow.pop %v485
      %v487 = vsel %vm270, %v480, 0.0
      %488 = vadd.xlane.f32.xlu0 %v487
      %v489 = vpop.xlane.xlu0 %488
      %v490 = vsel %vm270, %v482, 0.0
      %491 = vadd.xlane.f32.xlu0 %v490
      %v492 = vpop.xlane.xlu0 %491
      %v493 = vsel %vm270, %v484, 0.0
      %494 = vadd.xlane.f32.xlu0 %v493
      %v495 = vpop.xlane.xlu0 %494
      %v496 = vsel %vm270, %v486, 0.0
      %497 = vadd.xlane.f32.xlu0 %v496
      %v498 = vpop.xlane.xlu0 %497
      %v499 = vrcp.pop %v489
      %v500 = vrcp.pop %v492
      %v501 = vrcp.pop %v495
      %v502 = vrcp.pop %v498
      %v503 = vmul.f32 %v480, %v499
      %v504 = vmul.f32 %v482, %v500
      %v505 = vmul.f32 %v484, %v501
      %v506 = vmul.f32 %v486, %v502
      %v507 = vpack.c.bf16 %v503, %v503
      %v508 = vpack.c.bf16 %v504, %v504
      %v509 = vpack.c.bf16 %v505, %v505
      %v510 = vpack.c.bf16 %v506, %v506
      %v512 = vsel %vm270, %v507, 0
      %vm514 = vcmask 1043456
      %v516 = vsel %vm514, %v264, 0
      %518 = vmatprep.subr.bf16.mxu0 0
      %519 = vmatpush1.bf16.msra.mxu0 %v516
      %520 = vmatprep.subr.bf16.mxu0 0
      %521 = vmatpush1.bf16.msra.mxu0 0
      %522 = vmatprep.subr.bf16.mxu0 0
      %523 = vmatpush1.bf16.msra.mxu0 0
      %524 = vmatprep.subr.bf16.mxu0 0
      %525 = vmatpush1.bf16.msra.mxu0 0
      %526 = vmatprep.subr.bf16.mxu0 0
      %527 = vmatpush1.bf16.msra.mxu0 0
      %528 = vmatprep.subr.bf16.mxu0 0
      %529 = vmatpush1.bf16.msra.mxu0 0
      %530 = vmatprep.subr.bf16.mxu0 0
      %531 = vmatpush1.bf16.msra.mxu0 0
      %532 = vmatprep.subr.bf16.mxu0 0
      %533 = vmatpush1.bf16.msra.mxu0 0
      %534 = vmatprep.subr.bf16.mxu0 0
      %535 = vmatpush1.bf16.msra.mxu0 0
      %536 = vmatprep.subr.bf16.mxu0 0
      %537 = vmatpush1.bf16.msra.mxu0 0
      %538 = vmatprep.subr.bf16.mxu0 0
      %539 = vmatpush1.bf16.msra.mxu0 0
      %540 = vmatprep.subr.bf16.mxu0 0
      %541 = vmatpush1.bf16.msra.mxu0 0
      %542 = vmatprep.subr.bf16.mxu0 0
      %543 = vmatpush1.bf16.msra.mxu0 0
      %544 = vmatprep.subr.bf16.mxu0 0
      %545 = vmatpush1.bf16.msra.mxu0 0
      %546 = vmatprep.subr.bf16.mxu0 0
      %547 = vmatpush1.bf16.msra.mxu0 0
      %548 = vmatprep.subr.bf16.mxu0 0
      %549 = vmatpush1.bf16.msra.mxu0 0
      %550 = vmatprep.mubr.bf16.mxu0 0
      %551 = vmatmul.mubr.bf16.gmra.mrb[0].mxu0 %v512
      %v552 = vpop.f32.mrb[0].mxu0
      %v553 = vadd.f32 0.0, %v552
      %v554 = vpop.f32.mrb[0].mxu0
      %v555 = vpop.f32.mrb[0].mxu0
      %v556 = vpop.f32.mrb[0].mxu0
      %557 = vdwg.mxu0
      %v559 = vsel %vm270, %v508, 0
      %v562 = vsel %vm514, %v265, 0
      %564 = vmatprep.subr.bf16.mxu0 0
      %565 = vmatpush1.bf16.msra.mxu0 %v562
      %566 = vmatprep.subr.bf16.mxu0 0
      %567 = vmatpush1.bf16.msra.mxu0 0
      %568 = vmatprep.subr.bf16.mxu0 0
      %569 = vmatpush1.bf16.msra.mxu0 0
      %570 = vmatprep.subr.bf16.mxu0 0
      %571 = vmatpush1.bf16.msra.mxu0 0
      %572 = vmatprep.subr.bf16.mxu0 0
      %573 = vmatpush1.bf16.msra.mxu0 0
      %574 = vmatprep.subr.bf16.mxu0 0
      %575 = vmatpush1.bf16.msra.mxu0 0
      %576 = vmatprep.subr.bf16.mxu0 0
      %577 = vmatpush1.bf16.msra.mxu0 0
      %578 = vmatprep.subr.bf16.mxu0 0
      %579 = vmatpush1.bf16.msra.mxu0 0
      %580 = vmatprep.subr.bf16.mxu0 0
      %581 = vmatpush1.bf16.msra.mxu0 0
      %582 = vmatprep.subr.bf16.mxu0 0
      %583 = vmatpush1.bf16.msra.mxu0 0
      %584 = vmatprep.subr.bf16.mxu0 0
      %585 = vmatpush1.bf16.msra.mxu0 0
      %586 = vmatprep.subr.bf16.mxu0 0
      %587 = vmatpush1.bf16.msra.mxu0 0
      %588 = vmatprep.subr.bf16.mxu0 0
      %589 = vmatpush1.bf16.msra.mxu0 0
      %590 = vmatprep.subr.bf16.mxu0 0
      %591 = vmatpush1.bf16.msra.mxu0 0
      %592 = vmatprep.subr.bf16.mxu0 0
      %593 = vmatpush1.bf16.msra.mxu0 0
      %594 = vmatprep.subr.bf16.mxu0 0
      %595 = vmatpush1.bf16.msra.mxu0 0
      %596 = vmatprep.mubr.bf16.mxu0 0
      %597 = vmatmul.mubr.bf16.gmra.mrb[0].mxu0 %v559
      %v598 = vpop.f32.mrb[0].mxu0
      %v599 = vadd.f32 0.0, %v598
      %v600 = vpop.f32.mrb[0].mxu0
      %v601 = vpop.f32.mrb[0].mxu0
      %v602 = vpop.f32.mrb[0].mxu0
      %603 = vdwg.mxu0
      %v605 = vsel %vm270, %v509, 0
      %v608 = vsel %vm514, %v266, 0
      %610 = vmatprep.subr.bf16.mxu0 0
      %611 = vmatpush1.bf16.msra.mxu0 %v608
      %612 = vmatprep.subr.bf16.mxu0 0
      %613 = vmatpush1.bf16.msra.mxu0 0
      %614 = vmatprep.subr.bf16.mxu0 0
      %615 = vmatpush1.bf16.msra.mxu0 0
      %616 = vmatprep.subr.bf16.mxu0 0
      %617 = vmatpush1.bf16.msra.mxu0 0
      %618 = vmatprep.subr.bf16.mxu0 0
      %619 = vmatpush1.bf16.msra.mxu0 0
      %620 = vmatprep.subr.bf16.mxu0 0
      %621 = vmatpush1.bf16.msra.mxu0 0
      %622 = vmatprep.subr.bf16.mxu0 0
      %623 = vmatpush1.bf16.msra.mxu0 0
      %624 = vmatprep.subr.bf16.mxu0 0
      %625 = vmatpush1.bf16.msra.mxu0 0
      %626 = vmatprep.subr.bf16.mxu0 0
      %627 = vmatpush1.bf16.msra.mxu0 0
      %628 = vmatprep.subr.bf16.mxu0 0
      %629 = vmatpush1.bf16.msra.mxu0 0
      %630 = vmatprep.subr.bf16.mxu0 0
      %631 = vmatpush1.bf16.msra.mxu0 0
      %632 = vmatprep.subr.bf16.mxu0 0
      %633 = vmatpush1.bf16.msra.mxu0 0
      %634 = vmatprep.subr.bf16.mxu0 0
      %635 = vmatpush1.bf16.msra.mxu0 0
      %636 = vmatprep.subr.bf16.mxu0 0
      %637 = vmatpush1.bf16.msra.mxu0 0
      %638 = vmatprep.subr.bf16.mxu0 0
      %639 = vmatpush1.bf16.msra.mxu0 0
      %640 = vmatprep.subr.bf16.mxu0 0
      %641 = vmatpush1.bf16.msra.mxu0 0
      %642 = vmatprep.mubr.bf16.mxu0 0
      %643 = vmatmul.mubr.bf16.gmra.mrb[0].mxu0 %v605
      %v644 = vpop.f32.mrb[0].mxu0
      %v645 = vadd.f32 0.0, %v644
      %v646 = vpop.f32.mrb[0].mxu0
      %v647 = vpop.f32.mrb[0].mxu0
      %v648 = vpop.f32.mrb[0].mxu0
      %649 = vdwg.mxu0
      %v651 = vsel %vm270, %v510, 0
      %v654 = vsel %vm514, %v267, 0
      %656 = vmatprep.subr.bf16.mxu0 0
      %657 = vmatpush1.bf16.msra.mxu0 %v654
      %658 = vmatprep.subr.bf16.mxu0 0
      %659 = vmatpush1.bf16.msra.mxu0 0
      %660 = vmatprep.subr.bf16.mxu0 0
      %661 = vmatpush1.bf16.msra.mxu0 0
      %662 = vmatprep.subr.bf16.mxu0 0
      %663 = vmatpush1.bf16.msra.mxu0 0
      %664 = vmatprep.subr.bf16.mxu0 0
      %665 = vmatpush1.bf16.msra.mxu0 0
      %666 = vmatprep.subr.bf16.mxu0 0
      %667 = vmatpush1.bf16.msra.mxu0 0
      %668 = vmatprep.subr.bf16.mxu0 0
      %669 = vmatpush1.bf16.msra.mxu0 0
      %670 = vmatprep.subr.bf16.mxu0 0
      %671 = vmatpush1.bf16.msra.mxu0 0
      %672 = vmatprep.subr.bf16.mxu0 0
      %673 = vmatpush1.bf16.msra.mxu0 0
      %674 = vmatprep.subr.bf16.mxu0 0
      %675 = vmatpush1.bf16.msra.mxu0 0
      %676 = vmatprep.subr.bf16.mxu0 0
      %677 = vmatpush1.bf16.msra.mxu0 0
      %678 = vmatprep.subr.bf16.mxu0 0
      %679 = vmatpush1.bf16.msra.mxu0 0
      %680 = vmatprep.subr.bf16.mxu0 0
      %681 = vmatpush1.bf16.msra.mxu0 0
      %682 = vmatprep.subr.bf16.mxu0 0
      %683 = vmatpush1.bf16.msra.mxu0 0
      %684 = vmatprep.subr.bf16.mxu0 0
      %685 = vmatpush1.bf16.msra.mxu0 0
      %686 = vmatprep.subr.bf16.mxu0 0
      %687 = vmatpush1.bf16.msra.mxu0 0
      %688 = vmatprep.mubr.bf16.mxu0 0
      %689 = vmatmul.mubr.bf16.gmra.mrb[0].mxu0 %v651
      %v690 = vpop.f32.mrb[0].mxu0
      %v691 = vadd.f32 0.0, %v690
      %v692 = vpop.f32.mrb[0].mxu0
      %v693 = vpop.f32.mrb[0].mxu0
      %v694 = vpop.f32.mrb[0].mxu0
      %695 = vdwg.mxu0
      %v696 = vpack.c.bf16 %v553, %v553
      %v697 = vpack.c.bf16 %v599, %v599
      %v698 = vpack.c.bf16 %v645, %v645
      %v699 = vpack.c.bf16 %v691, %v691
      %vm700 = vcmask 60416
      %701 = vst.msk [vmem:[%s254] sm:$0xf] %vm700, %v696
      %702 = vst.msk [vmem:[%s254 + $0x4] sm:$0xf] %vm700, %v697
      %703 = vst.msk [vmem:[%s254 + $0x8] sm:$0xf] %vm700, %v698
      %704 = vst.msk [vmem:[%s254 + $0xc] sm:$0xf] %vm700, %v699
      %p705 = scmp.lt.s32.totalorder %s15, 1
      %s706 = scalar_select %p705, %s15, 1
      %s707 = smul.addr %s706, 4
      %s708 = smul.addr %s707, 4
      %s709 = scalar_lea.vmem %s4, %s708
      // Predicated region
      $region37: #{encoder_forward.15} parent=35 // pred_check
        %p710 = pneg %p137
      $region38: #{encoder_forward.15} parent=35 // pred_check_branch
        %712 = sbr.rel (%p710) target = $region40
      $region39: #{encoder_forward.15} parent=35 // pred_region
        _
      $region40: #{encoder_forward.15} parent=35 // pred_fallthru
        _
    $region36: #{encoder_forward.15} parent=5 // pred_fallthru
      _
    %p713 = scmp.le.s32.totalorder 2, %s10
    // Predicated region
    $region41: #{encoder_forward.15} parent=5 // pred_check
      %p714 = pneg %p713
    $region42: #{encoder_forward.15} parent=5 // pred_check_branch
      %716 = sbr.rel (%p714) target = $region44
    $region43: #{encoder_forward.15} parent=5 // pred_region
      %s717 = ssub.s32 %s10, 2
      // Predicated region
      $region45: #{encoder_forward.15} parent=43 // pred_check
        %p718 = pneg %p143
      $region46: #{encoder_forward.15} parent=43 // pred_check_branch
        %720 = sbr.rel (%p718) target = $region48
      $region47: #{encoder_forward.15} parent=43 // pred_region
        %p721 = scmp.lt.s32.totalorder %s16, 1
        %s722 = scalar_select %p721, %s16, 1
        %s723 = smul.addr %s722, 4
        %s724 = smul.addr %s723, 4
        %s725 = scalar_lea.vmem %s4, %s724
      $region48: #{encoder_forward.15} parent=43 // pred_fallthru
        _
    $region44: #{encoder_forward.15} parent=5 // pred_fallthru
      _
  $region6: #{encoder_forward.15} parent=0 // loop_footer
    %s14 = sadd.s32 1, %s10
  $region7: #{encoder_forward.15} parent=0 // loop_footer_branch
    %9 = sbr.rel target = $region3
  $region8: #{encoder_forward.15} parent=0 // loop_exit
    _

// kernel: encoder_forward.18
$region0: #{encoder_forward.18}
  #allocation0 [shape = 'u32[]', space=smem, size = 0x4, offset = 0x4, fixed_abs, tag = 'smem constant byte address 0x4 - core index']
  #allocation1 [shape = 'u32[144,128]{1,0:T(1,128)}', space=vmem, size = 0x12000, scoped, tag = 'internal scratch']
  #allocation2 [shape = 'f32[16,64]{1,0:T(8,128)}', space=vmem, size = 0x2000, scoped, tag = 'scratch operand']
  %s0 = inlined_call_operand.vmem [shape: f32[16,32], index: 0, kind: input, shape index: {}]
  %s1 = inlined_call_operand.vmem [shape: bf16[32,64], index: 1, kind: input, shape index: {}]
  %s2 = inlined_call_operand.vmem [shape: f32[1,64], index: 2, kind: input, shape index: {}]
  %s3 = inlined_call_operand.vmem [shape: bf16[16,64], index: 3, kind: output, shape index: {}]
  %s4 = sld [smem:[#allocation0]]
  $region30: #{encoder_forward.18} parent=0
    _
  %s6 = ssub.s32 1, %s4
  %s7 = scalar_select 0, %s6, %s4
  // Predicated region
  $region2: #{encoder_forward.18} parent=0 // pred_check
    _
  $region3: #{encoder_forward.18} parent=0 // pred_check_branch
    %9 = sbr.rel (0) target = $region5
  $region4: #{encoder_forward.18} parent=0 // pred_region
    _
  $region5: #{encoder_forward.18} parent=0 // pred_fallthru
    _
  // Predicated region
  $region6: #{encoder_forward.18} parent=0 // pred_check
    _
  $region7: #{encoder_forward.18} parent=0 // pred_check_branch
    %11 = sbr.rel (0) target = $region9
  $region8: #{encoder_forward.18} parent=0 // pred_region
    _
  $region9: #{encoder_forward.18} parent=0 // pred_fallthru
    _
  // Predicated region
  $region10: #{encoder_forward.18} parent=0 // pred_check
    _
  $region11: #{encoder_forward.18} parent=0 // pred_check_branch
    %13 = sbr.rel (0) target = $region13
  $region12: #{encoder_forward.18} parent=0 // pred_region
    _
  $region13: #{encoder_forward.18} parent=0 // pred_fallthru
    _
  %p15 = scmp.eq.s32.totalorder 0, 0
  // Predicated region
  $region14: #{encoder_forward.18} parent=0 // pred_check
    %p16 = pneg %p15
  $region15: #{encoder_forward.18} parent=0 // pred_check_branch
    %18 = sbr.rel (%p16) target = $region17
  $region16: #{encoder_forward.18} parent=0 // pred_region
    %vm19 = vcmask 523264
    %20 = vst.msk [vmem:[#allocation2] sm:$0xff] %vm19, 0.0
    %21 = vst.msk [vmem:[#allocation2 + $0x8] sm:$0xff] %vm19, 0.0
  $region17: #{encoder_forward.18} parent=0 // pred_fallthru
    _
  %v22 = vld [vmem:[#allocation2] sm:$0xff]
  %v23 = vld [vmem:[#allocation2 + $0x8] sm:$0xff]
  %v24 = vld [vmem:[%s0] sm:$0xff]
  %v25 = vld [vmem:[%s0 + $0x8] sm:$0xff]
  %v26 = vpack.c.bf16 %v25, %v24
  %v27 = vld [vmem:[%s1] sm:$0xf]
  %v28 = vld [vmem:[%s1 + $0x4] sm:$0xf]
  %v29 = vld [vmem:[%s1 + $0x8] sm:$0xf]
  %v30 = vld [vmem:[%s1 + $0xc] sm:$0xf]
  %v35 = vunpack.c.l.b16 %v27
  %v36 = vunpack.c.l.b16 %v28
  %v37 = vunpack.c.l.b16 %v29
  %v38 = vunpack.c.l.b16 %v30
  %v39 = vpack.c.b16 %v36, %v35
  %v40 = vpack.c.b16 %v38, %v37
  %vm43 = vcmask 261120
  %v45 = vsel %vm43, %v26, 0
  %47 = vmatprep.subr.bf16.mxu0 0
  %48 = vmatpush1.bf16.msra.mxu0 %v39
  %49 = vmatprep.subr.bf16.mxu0 0
  %50 = vmatpush1.bf16.msra.mxu0 %v40
  %51 = vmatprep.subr.bf16.mxu0 0
  %52 = vmatpush1.bf16.msra.mxu0 0
  %53 = vmatprep.subr.bf16.mxu0 0
  %54 = vmatpush1.bf16.msra.mxu0 0
  %55 = vmatprep.subr.bf16.mxu0 0
  %56 = vmatpush1.bf16.msra.mxu0 0
  %57 = vmatprep.subr.bf16.mxu0 0
  %58 = vmatpush1.bf16.msra.mxu0 0
  %59 = vmatprep.subr.bf16.mxu0 0
  %60 = vmatpush1.bf16.msra.mxu0 0
  %61 = vmatprep.subr.bf16.mxu0 0
  %62 = vmatpush1.bf16.msra.mxu0 0
  %63 = vmatprep.subr.bf16.mxu0 0
  %64 = vmatpush1.bf16.msra.mxu0 0
  %65 = vmatprep.subr.bf16.mxu0 0
  %66 = vmatpush1.bf16.msra.mxu0 0
  %67 = vmatprep.subr.bf16.mxu0 0
  %68 = vmatpush1.bf16.msra.mxu0 0
  %69 = vmatprep.subr.bf16.mxu0 0
  %70 = vmatpush1.bf16.msra.mxu0 0
  %71 = vmatprep.subr.bf16.mxu0 0
  %72 = vmatpush1.bf16.msra.mxu0 0
  %73 = vmatprep.subr.bf16.mxu0 0
  %74 = vmatpush1.bf16.msra.mxu0 0
  %75 = vmatprep.subr.bf16.mxu0 0
  %76 = vmatpush1.bf16.msra.mxu0 0
  %77 = vmatprep.subr.bf16.mxu0 0
  %78 = vmatpush1.bf16.msra.mxu0 0
  %79 = vmatprep.mubr.bf16.mxu0 0
  %80 = vmatmul.mubr.bf16.gmra.mrb[0].mxu0 %v45
  %v81 = vpop.f32.mrb[0].mxu0
  %v82 = vadd.f32 0.0, %v81
  %v83 = vpop.f32.mrb[0].mxu0
  %v84 = vpop.f32.mrb[0].mxu0
  %v85 = vadd.f32 0.0, %v84
  %v86 = vpop.f32.mrb[0].mxu0
  %87 = vdwg.mxu0
  %v88 = vadd.f32 %v22, %v82
  %v89 = vadd.f32 %v23, %v85
  %vm90 = vcmask 523264
  %91 = vst.msk [vmem:[#allocation2] sm:$0xff] %vm90, %v88
  %92 = vst.msk [vmem:[#allocation2 + $0x8] sm:$0xff] %vm90, %v89
  // Predicated region
  $region18: #{encoder_forward.18} parent=0 // pred_check
    %p93 = pneg %p15
  $region19: #{encoder_forward.18} parent=0 // pred_check_branch
    %95 = sbr.rel (%p93) target = $region21
  $region20: #{encoder_forward.18} parent=0 // pred_region
    %v96 = vld [vmem:[#allocation2] sm:$0xff]
    %v97 = vld [vmem:[#allocation2 + $0x8] sm:$0xff]
    %v98 = vld [vmem:[%s2] sm:$0x1]
    %v100 = vlaneseq
    %v101 = vshrl.u32 %v100, 7
    %v102 = vsub.s32 0, %v101
    %v103 = vrot.slane %v98, %v102
    %v105 = vadd.f32 %v96, %v103
    %v106 = vadd.f32 %v97, %v103
    %v107 = vmax.f32 %v105, 0.0
    %v108 = vmax.f32 %v106, 0.0
    %v109 = vpack.c.bf16 %v108, %v107
    %v111 = vunpack.c.l.b16 %v109
    %v112 = vunpack.c.h.b16 %v109
    %v113 = vpack.c.b16 %v111, %v111
    %v114 = vpack.c.b16 %v112, %v112
    %vm117 = vcmask 519168
    %118 = vst.msk [vmem:[%s3] sm:$0xf] %vm117, %v113
    %119 = vst.msk [vmem:[%s3 + $0x4] sm:$0xf] %vm117, %v114
  $region21: #{encoder_forward.18} parent=0 // pred_fallthru
    _
  // Predicated region
  $region22: #{encoder_forward.18} parent=0 // pred_check
    _
  $region23: #{encoder_forward.18} parent=0 // pred_check_branch
    %121 = sbr.rel (0) target = $region25
  $region24: #{encoder_forward.18} parent=0 // pred_region
    _
  $region25: #{encoder_forward.18} parent=0 // pred_fallthru
    _
  // Predicated region
  $region26: #{encoder_forward.18} parent=0 // pred_check
    _
  $region27: #{encoder_forward.18} parent=0 // pred_check_branch
    %123 = sbr.rel (0) target = $region29
  $region28: #{encoder_forward.18} parent=0 // pred_region
    _
  $region29: #{encoder_forward.18} parent=0 // pred_fallthru
    _

// kernel: encoder_forward.19
$region0: #{encoder_forward.19}
  #allocation0 [shape = 'u32[]', space=smem, size = 0x4, offset = 0x4, fixed_abs, tag = 'smem constant byte address 0x4 - core index']
  #allocation1 [shape = 'u32[144,128]{1,0:T(1,128)}', space=vmem, size = 0x12000, scoped, tag = 'internal scratch']
  #allocation2 [shape = 'f32[16,32]{1,0:T(8,128)}', space=vmem, size = 0x2000, scoped, tag = 'scratch operand']
  %s0 = inlined_call_operand.vmem [shape: bf16[16,64], index: 0, kind: input, shape index: {}]
  %s1 = inlined_call_operand.vmem [shape: bf16[64,32], index: 1, kind: input, shape index: {}]
  %s2 = inlined_call_operand.vmem [shape: f32[1,32], index: 2, kind: input, shape index: {}]
  %s3 = inlined_call_operand.vmem [shape: f32[16,32], index: 3, kind: output, shape index: {}]
  %s4 = sld [smem:[#allocation0]]
  $region30: #{encoder_forward.19} parent=0
    _
  %s6 = ssub.s32 1, %s4
  %s7 = scalar_select 0, %s6, %s4
  // Predicated region
  $region2: #{encoder_forward.19} parent=0 // pred_check
    _
  $region3: #{encoder_forward.19} parent=0 // pred_check_branch
    %9 = sbr.rel (0) target = $region5
  $region4: #{encoder_forward.19} parent=0 // pred_region
    _
  $region5: #{encoder_forward.19} parent=0 // pred_fallthru
    _
  // Predicated region
  $region6: #{encoder_forward.19} parent=0 // pred_check
    _
  $region7: #{encoder_forward.19} parent=0 // pred_check_branch
    %11 = sbr.rel (0) target = $region9
  $region8: #{encoder_forward.19} parent=0 // pred_region
    _
  $region9: #{encoder_forward.19} parent=0 // pred_fallthru
    _
  // Predicated region
  $region10: #{encoder_forward.19} parent=0 // pred_check
    _
  $region11: #{encoder_forward.19} parent=0 // pred_check_branch
    %13 = sbr.rel (0) target = $region13
  $region12: #{encoder_forward.19} parent=0 // pred_region
    _
  $region13: #{encoder_forward.19} parent=0 // pred_fallthru
    _
  %p15 = scmp.eq.s32.totalorder 0, 0
  // Predicated region
  $region14: #{encoder_forward.19} parent=0 // pred_check
    %p16 = pneg %p15
  $region15: #{encoder_forward.19} parent=0 // pred_check_branch
    %18 = sbr.rel (%p16) target = $region17
  $region16: #{encoder_forward.19} parent=0 // pred_region
    %vm19 = vcmask 261120
    %20 = vst.msk [vmem:[#allocation2] sm:$0xff] %vm19, 0.0
    %21 = vst.msk [vmem:[#allocation2 + $0x8] sm:$0xff] %vm19, 0.0
  $region17: #{encoder_forward.19} parent=0 // pred_fallthru
    _
  %v22 = vld [vmem:[#allocation2] sm:$0xff]
  %v23 = vld [vmem:[#allocation2 + $0x8] sm:$0xff]
  %v24 = vld [vmem:[%s0] sm:$0xf]
  %v25 = vld [vmem:[%s0 + $0x4] sm:$0xf]
  %v26 = vld [vmem:[%s1] sm:$0xf]
  %v27 = vld [vmem:[%s1 + $0x4] sm:$0xf]
  %v28 = vld [vmem:[%s1 + $0x8] sm:$0xf]
  %v29 = vld [vmem:[%s1 + $0xc] sm:$0xf]
  %v30 = vld [vmem:[%s1 + $0x10] sm:$0xf]
  %v31 = vld [vmem:[%s1 + $0x14] sm:$0xf]
  %v32 = vld [vmem:[%s1 + $0x18] sm:$0xf]
  %v33 = vld [vmem:[%s1 + $0x1c] sm:$0xf]
  %v36 = vunpack.c.l.b16 %v24
  %v37 = vunpack.c.l.b16 %v25
  %v38 = vpack.c.b16 %v37, %v36
  %v47 = vunpack.c.l.b16 %v26
  %v48 = vunpack.c.l.b16 %v27
  %v49 = vunpack.c.l.b16 %v28
  %v50 = vunpack.c.l.b16 %v29
  %v51 = vunpack.c.l.b16 %v30
  %v52 = vunpack.c.l.b16 %v31
  %v53 = vunpack.c.l.b16 %v32
  %v54 = vunpack.c.l.b16 %v33
  %v55 = vpack.c.b16 %v48, %v47
  %v56 = vpack.c.b16 %v50, %v49
  %v57 = vpack.c.b16 %v52, %v51
  %v58 = vpack.c.b16 %v54, %v53
  %vm63 = vcmask 523264
  %v65 = vsel %vm63, %v38, 0
  %67 = vmatprep.subr.bf16.mxu0 0
  %68 = vmatpush1.bf16.msra.mxu0 %v55
  %69 = vmatprep.subr.bf16.mxu0 0
  %70 = vmatpush1.bf16.msra.mxu0 %v56
  %71 = vmatprep.subr.bf16.mxu0 0
  %72 = vmatpush1.bf16.msra.mxu0 %v57
  %73 = vmatprep.subr.bf16.mxu0 0
  %74 = vmatpush1.bf16.msra.mxu0 %v58
  %75 = vmatprep.subr.bf16.mxu0 0
  %76 = vmatpush1.bf16.msra.mxu0 0
  %77 = vmatprep.subr.bf16.mxu0 0
  %78 = vmatpush1.bf16.msra.mxu0 0
  %79 = vmatprep.subr.bf16.mxu0 0
  %80 = vmatpush1.bf16.msra.mxu0 0
  %81 = vmatprep.subr.bf16.mxu0 0
  %82 = vmatpush1.bf16.msra.mxu0 0
  %83 = vmatprep.subr.bf16.mxu0 0
  %84 = vmatpush1.bf16.msra.mxu0 0
  %85 = vmatprep.subr.bf16.mxu0 0
  %86 = vmatpush1.bf16.msra.mxu0 0
  %87 = vmatprep.subr.bf16.mxu0 0
  %88 = vmatpush1.bf16.msra.mxu0 0
  %89 = vmatprep.subr.bf16.mxu0 0
  %90 = vmatpush1.bf16.msra.mxu0 0
  %91 = vmatprep.subr.bf16.mxu0 0
  %92 = vmatpush1.bf16.msra.mxu0 0
  %93 = vmatprep.subr.bf16.mxu0 0
  %94 = vmatpush1.bf16.msra.mxu0 0
  %95 = vmatprep.subr.bf16.mxu0 0
  %96 = vmatpush1.bf16.msra.mxu0 0
  %97 = vmatprep.subr.bf16.mxu0 0
  %98 = vmatpush1.bf16.msra.mxu0 0
  %99 = vmatprep.mubr.bf16.mxu0 0
  %100 = vmatmul.mubr.bf16.gmra.mrb[0].mxu0 %v65
  %v101 = vpop.f32.mrb[0].mxu0
  %v102 = vadd.f32 0.0, %v101
  %v103 = vpop.f32.mrb[0].mxu0
  %v104 = vpop.f32.mrb[0].mxu0
  %v105 = vadd.f32 0.0, %v104
  %v106 = vpop.f32.mrb[0].mxu0
  %107 = vdwg.mxu0
  %v108 = vadd.f32 %v22, %v102
  %v109 = vadd.f32 %v23, %v105
  %vm110 = vcmask 261120
  %111 = vst.msk [vmem:[#allocation2] sm:$0xff] %vm110, %v108
  %112 = vst.msk [vmem:[#allocation2 + $0x8] sm:$0xff] %vm110, %v109
  // Predicated region
  $region18: #{encoder_forward.19} parent=0 // pred_check
    %p113 = pneg %p15
  $region19: #{encoder_forward.19} parent=0 // pred_check_branch
    %115 = sbr.rel (%p113) target = $region21
  $region20: #{encoder_forward.19} parent=0 // pred_region
    %v116 = vld [vmem:[#allocation2] sm:$0xff]
    %v117 = vld [vmem:[#allocation2 + $0x8] sm:$0xff]
    %v118 = vld [vmem:[%s2] sm:$0x1]
    %v120 = vlaneseq
    %v121 = vshrl.u32 %v120, 7
    %v122 = vsub.s32 0, %v121
    %v123 = vrot.slane %v118, %v122
    %v125 = vadd.f32 %v116, %v123
    %v126 = vadd.f32 %v117, %v123
    %127 = vst.msk [vmem:[%s3] sm:$0xff] %vm110, %v125
    %128 = vst.msk [vmem:[%s3 + $0x8] sm:$0xff] %vm110, %v126
  $region21: #{encoder_forward.19} parent=0 // pred_fallthru
    _
  // Predicated region
  $region22: #{encoder_forward.19} parent=0 // pred_check
    _
  $region23: #{encoder_forward.19} parent=0 // pred_check_branch
    %130 = sbr.rel (0) target = $region25
  $region24: #{encoder_forward.19} parent=0 // pred_region
    _
  $region25: #{encoder_forward.19} parent=0 // pred_fallthru
    _
  // Predicated region
  $region26: #{encoder_forward.19} parent=0 // pred_check
    _
  $region27: #{encoder_forward.19} parent=0 // pred_check_branch
    %132 = sbr.rel (0) target = $region29
  $region28: #{encoder_forward.19} parent=0 // pred_region
    _
  $region29: #{encoder_forward.19} parent=0 // pred_fallthru
    _

// kernel: encoder_forward.27
$region0: #{encoder_forward.27}
  #allocation0 [shape = 'u32[]', space=smem, size = 0x4, offset = 0x4, fixed_abs, tag = 'smem constant byte address 0x4 - core index']
  #allocation1 [shape = 'u32[144,128]{1,0:T(1,128)}', space=vmem, size = 0x12000, scoped, tag = 'internal scratch']
  %s0 = inlined_call_operand.vmem [shape: f32[16,32], index: 0, kind: input, shape index: {}]
  %s1 = inlined_call_operand.vmem [shape: f32[16,32], index: 1, kind: input, shape index: {}]
  %s2 = inlined_call_operand.vmem [shape: f32[1,32], index: 2, kind: input, shape index: {}]
  %s3 = inlined_call_operand.vmem [shape: f32[1,32], index: 3, kind: input, shape index: {}]
  %s4 = inlined_call_operand.hbm [shape: f32[16,32], index: 4, kind: output, shape index: {}]
  %s5 = sld [smem:[#allocation0]]
  $region26: #{encoder_forward.27} parent=0
    _
  %s7 = ssub.s32 1, %s5
  %s8 = scalar_select 0, %s7, %s5
  $region1: #{encoder_forward.27} parent=0
    #allocation2 [shape = 'u8[8192]{0}', space=vmem, size = 0x2000, scoped, tag = 'output window, operand 0, single buffered']
    #allocation3 [shape = 's32[1]{0}', space=sflag, size = 0x4, scoped, tag = 'scoped memory for encoder_forward.27']
    %9 = vsyncpa [#allocation3], 0
    // Predicated region
    $region2: #{encoder_forward.27} parent=1 // pred_check
      _
    $region3: #{encoder_forward.27} parent=1 // pred_check_branch
      %11 = sbr.rel (0) target = $region5
    $region4: #{encoder_forward.27} parent=1 // pred_region
      _
    $region5: #{encoder_forward.27} parent=1 // pred_fallthru
      _
    // Predicated region
    $region6: #{encoder_forward.27} parent=1 // pred_check
      _
    $region7: #{encoder_forward.27} parent=1 // pred_check_branch
      %13 = sbr.rel (0) target = $region9
    $region8: #{encoder_forward.27} parent=1 // pred_region
      _
    $region9: #{encoder_forward.27} parent=1 // pred_fallthru
      _
    // Predicated region
    $region10: #{encoder_forward.27} parent=1 // pred_check
      _
    $region11: #{encoder_forward.27} parent=1 // pred_check_branch
      %15 = sbr.rel (0) target = $region13
    $region12: #{encoder_forward.27} parent=1 // pred_region
      _
    $region13: #{encoder_forward.27} parent=1 // pred_fallthru
      _
    // Predicated region
    $region14: #{encoder_forward.27} parent=1 // pred_check
      _
    $region15: #{encoder_forward.27} parent=1 // pred_check_branch
      %17 = sbr.rel (0) target = $region17
    $region16: #{encoder_forward.27} parent=1 // pred_region
      _
    $region17: #{encoder_forward.27} parent=1 // pred_fallthru
      _
    %v18 = vld [vmem:[%s0] sm:$0xff]
    %v19 = vld [vmem:[%s0 + $0x8] sm:$0xff]
    %v20 = vld [vmem:[%s1] sm:$0xff]
    %v21 = vld [vmem:[%s1 + $0x8] sm:$0xff]
    %v22 = vadd.f32 %v18, %v20
    %v23 = vadd.f32 %v19, %v21
    %vm24 = vcmask 261120
    %v25 = vsel %vm24, %v22, 0.0
    %26 = vadd.xlane.f32.xlu0 %v25
    %v27 = vpop.xlane.xlu0 %26
    %v28 = vsel %vm24, %v23, 0.0
    %29 = vadd.xlane.f32.xlu0 %v28
    %v30 = vpop.xlane.xlu0 %29
    %v31 = vrcp.pop 32.0
    %v32 = vmul.f32 %v27, %v31
    %v33 = vmul.f32 %v30, %v31
    %v34 = vsub.f32 %v22, %v32
    %v35 = vsub.f32 %v23, %v33
    %v36 = vmul.f32 %v34, %v34
    %v37 = vmul.f32 %v35, %v35
    %v38 = vsel %vm24, %v36, 0.0
    %39 = vadd.xlane.f32.xlu0 %v38
    %v40 = vpop.xlane.xlu0 %39
    %v41 = vsel %vm24, %v37, 0.0
    %42 = vadd.xlane.f32.xlu0 %v41
    %v43 = vpop.xlane.xlu0 %42
    %v44 = vmul.f32 %v40, %v31
    %v45 = vmul.f32 %v43, %v31
    %v46 = vadd.f32 %v44, 1e-05
    %v47 = vadd.f32 %v45, 1e-05
    %v48 = vrsqrt.pop %v46
    %v49 = vrsqrt.pop %v47
    %v50 = vmul.f32 %v34, %v48
    %v51 = vmul.f32 %v35, %v49
    %v52 = vld [vmem:[%s2] sm:$0x1]
    %v54 = vlaneseq
    %v55 = vshrl.u32 %v54, 7
    %v56 = vsub.s32 0, %v55
    %v57 = vrot.slane %v52, %v56
    %v59 = vmul.f32 %v50, %v57
    %v60 = vmul.f32 %v51, %v57
    %v61 = vld [vmem:[%s3] sm:$0x1]
    %v63 = vlaneseq
    %v64 = vshrl.u32 %v63, 7
    %v65 = vsub.s32 0, %v64
    %v66 = vrot.slane %v61, %v65
    %v68 = vadd.f32 %v59, %v66
    %v69 = vadd.f32 %v60, %v66
    %70 = vst.msk [vmem:[#allocation2] sm:$0xff] %vm24, %v68
    %71 = vst.msk [vmem:[#allocation2 + $0x8] sm:$0xff] %vm24, %v69
    // Predicated region
    $region18: #{encoder_forward.27} parent=1 // pred_check
      _
    $region19: #{encoder_forward.27} parent=1 // pred_check_branch
      %73 = sbr.rel (0) target = $region21
    $region20: #{encoder_forward.27} parent=1 // pred_region
      %s75 = ssub.s32 256, 256
      %76 = vsyncadd [#allocation3], %s75
      %s77 = sshll.u32 [#allocation2], 4
      %s78 = int_to_ptr.vmem [resolvable:$true] %s77
      %83 = dma.vmem_to_hbm [thread:$0]  %s78, 256, %s4, [#allocation3], 128, 128, 8
    $region21: #{encoder_forward.27} parent=1 // pred_fallthru
      _
    // Predicated region
    $region22: #{encoder_forward.27} parent=1 // pred_check
      _
    $region23: #{encoder_forward.27} parent=1 // pred_check_branch
      %85 = sbr.rel (0) target = $region25
    $region24: #{encoder_forward.27} parent=1 // pred_region
      %86 = dma.done [#allocation3], 256
    $region25: #{encoder_forward.27} parent=1 // pred_fallthru
      _
    %87 = vsyncpa [#allocation3], 1

</llo_original>
